<compile_context>
chip_gen: v7x
topology: tpu7x:2x2x1
jax: 0.10.0
libtpu: 0.0.40
codegen_flags: <defaults>
</compile_context>

<pallas_src>
import functools

import jax
import jax.numpy as jnp
from jax.experimental import pallas as pl
from jax.experimental.pallas import tpu as pltpu

BN_EPS = 1e-5


# ----------------------------------------------------------------------------- helpers
def _round_up(x, m):
    return ((x + m - 1) // m) * m


def _pad2d(x, rows, cols):
    return jnp.pad(x, ((0, rows - x.shape[0]), (0, cols - x.shape[1])))


def _pad1d(x, n):
    return jnp.pad(x, (0, n - x.shape[0]))


def _vmem_limit_bytes():
    """Per-generation VMEM budget: leave headroom on v7x (64 MiB physical per TC)."""
    try:
        kind = jax.devices()[0].device_kind.lower()
    except Exception:
        return 48 * 1024 * 1024
    if "v5" in kind or "v6" in kind:     # 128 MiB physical VMEM
        return 96 * 1024 * 1024
    return 48 * 1024 * 1024              # v7x / unknown: conservative


def _bn_scale_shift(stats, count, gamma, beta):
    """Fold training-mode BN (one-pass moments) into y = x * scale + shift."""
    s = jnp.sum(stats[:, 0, :], axis=0)
    ss = jnp.sum(stats[:, 1, :], axis=0)
    mean = s / count
    var = jnp.maximum(ss / count - mean * mean, 0.0)
    inv = jax.lax.rsqrt(var + BN_EPS)
    scale = gamma.astype(jnp.float32) * inv
    shift = beta.astype(jnp.float32) - mean * scale
    return scale.reshape(1, -1), shift.reshape(1, -1)


def _partial_moments(x, row_offset, n_real):
    """Masked per-tile (sum, sum of squares) over valid node rows, packed as [8, F]."""
    rows = jax.lax.broadcasted_iota(jnp.int32, x.shape, 0) + row_offset
    valid = (rows < n_real).astype(jnp.float32)
    xm = x * valid
    s = jnp.sum(xm, axis=0, keepdims=True)
    ss = jnp.sum(xm * xm, axis=0, keepdims=True)
    ridx = jax.lax.broadcasted_iota(jnp.int32, (8, x.shape[1]), 0)
    return jnp.where(ridx == 0, s, 0.0) + jnp.where(ridx == 1, ss, 0.0)


# ----------------------------------------------------------------------------- kernels
def _agg_linear1_kernel(mask_ref, eps_ref, adj_ref, hk_ref, hrow_ref, w1_ref, b1_ref,
                        a1_ref, stats_ref, acc_ref, *, n_real, tile_n):
    """Pass 1: agg = A @ h (tiled over the contraction axis, block-sparse skip),
       z = (1+eps)*h + agg, a1 = z @ W1^T + b1, plus masked BN1 partial moments."""
    i = pl.program_id(0)
    k = pl.program_id(1)
    nk = pl.num_programs(1)

    @pl.when(k == 0)
    def _():
        acc_ref[...] = jnp.zeros_like(acc_ref)

    # Skip MXU work for all-zero adjacency blocks (block-level sparsity).
    @pl.when(mask_ref[i, k] != 0)
    def _():
        acc_ref[...] += jnp.dot(adj_ref[...], hk_ref[...],
                                preferred_element_type=jnp.float32)

    @pl.when(k == nk - 1)
    def _():
        z = (1.0 + eps_ref[0]) * hrow_ref[...] + acc_ref[...]           # f32
        a1 = jnp.dot(z.astype(w1_ref.dtype), w1_ref[...].T,
                     preferred_element_type=jnp.float32) + b1_ref[...]
        a1_ref[...] = a1
        stats_ref[0] = _partial_moments(a1, i * tile_n, n_real)


def _bn1_linear2_kernel(scale1_ref, shift1_ref, a1_ref, w2_ref, b2_ref,
                        a2_ref, stats_ref, *, n_real, tile_n):
    """Pass 2: h1 = relu(BN1(a1)), a2 = h1 @ W2^T + b2, plus masked BN2 partial moments."""
    i = pl.program_id(0)
    h1 = jnp.maximum(a1_ref[...] * scale1_ref[...] + shift1_ref[...], 0.0)
    a2 = jnp.dot(h1.astype(w2_ref.dtype), w2_ref[...].T,
                 preferred_element_type=jnp.float32) + b2_ref[...]
    a2_ref[...] = a2
    stats_ref[0] = _partial_moments(a2, i * tile_n, n_real)


def _bn2_residual_kernel(scale2_ref, shift2_ref, a2_ref, hres_ref, out_ref, *,
                         apply_residual):
    """Pass 3: y = relu(BN_node(a2)) (+ h residual).  Dropout p=0 -> identity."""
    y = jnp.maximum(a2_ref[...] * scale2_ref[...] + shift2_ref[...], 0.0)
    if apply_residual:
        y = hres_ref[...] + y
    out_ref[...] = y.astype(out_ref.dtype)


# ----------------------------------------------------------------------------- wrapper
def gin_layer_forward(adj, h, params, *, residual=True, matmul_dtype=jnp.bfloat16,
                      tile_n=None, tile_k=None):
    """adj: [N, N] dense edge-weighted adjacency (A[v,u] = weight of edge u->v).
       h:   [N, in_dim] node features.  params: dict of weights (see __main__)."""
    n, in_dim = h.shape
    hidden_dim = params["w1"].shape[0]
    out_dim = params["w2"].shape[0]
    apply_residual = bool(residual) and (in_dim == out_dim)

    # --- tiling of the node axis (rows and contraction columns of adj) ---
    if tile_k is None:
        tile_k = min(1024, _round_up(n, 128))
    if tile_n is None:
        tile_n = min(512, tile_k)
    assert tile_k % tile_n == 0 and tile_n % 8 == 0 and tile_k % 128 == 0
    np_ = _round_up(n, tile_k)
    nr, nk = np_ // tile_n, np_ // tile_k

    # --- lane-dense feature padding (multiples of 128) ---
    d_pad = _round_up(in_dim, 128)
    h_pad_dim = _round_up(hidden_dim, 128)
    o_pad = _round_up(out_dim, 128)

    f32 = jnp.float32
    adj_p = _pad2d(adj.astype(f32), np_, np_)
    h_p = _pad2d(h.astype(f32), np_, d_pad)

    # Block-level nonzero mask for scalar prefetch.  (In production this comes straight
    # from the sparse graph structure instead of a dense scan.)
    block_mask = jnp.any(
        adj_p.reshape(nr, tile_n, nk, tile_k) != 0, axis=(1, 3)).astype(jnp.int32)

    # bf16 staging for the MXU streams (padding/cast could be hoisted to param-load time).
    adj_mm = adj_p.astype(matmul_dtype)
    h_mm = h_p.astype(matmul_dtype)
    w1_mm = _pad2d(params["w1"].astype(f32), h_pad_dim, d_pad).astype(matmul_dtype)
    w2_mm = _pad2d(params["w2"].astype(f32), o_pad, h_pad_dim).astype(matmul_dtype)
    b1_p = _pad1d(params["b1"].astype(f32), h_pad_dim).reshape(1, -1)
    b2_p = _pad1d(params["b2"].astype(f32), o_pad).reshape(1, -1)
    eps = jnp.asarray(params["eps"], f32).reshape((1,))

    vmem_limit = _vmem_limit_bytes()

    # ---------------- pass 1: aggregation + linear1 + BN1 moments ----------------
    a1_p, stats1 = pl.pallas_call(
        functools.partial(_agg_linear1_kernel, n_real=n, tile_n=tile_n),
        out_shape=(jax.ShapeDtypeStruct((np_, h_pad_dim), f32),
                   jax.ShapeDtypeStruct((nr, 8, h_pad_dim), f32)),
        grid_spec=pltpu.PrefetchScalarGridSpec(
            num_scalar_prefetch=1,
            grid=(nr, nk),
            in_specs=[
                pl.BlockSpec(memory_space=pltpu.MemorySpace.SMEM),         # eps
                pl.BlockSpec((tile_n, tile_k), lambda i, k, m: (i, k)),    # adj tile
                pl.BlockSpec((tile_k, d_pad), lambda i, k, m: (k, 0)),     # h (contraction)
                pl.BlockSpec((tile_n, d_pad), lambda i, k, m: (i, 0)),     # h (row term)
                pl.BlockSpec((h_pad_dim, d_pad), lambda i, k, m: (0, 0)),  # W1 [out,in]
                pl.BlockSpec((1, h_pad_dim), lambda i, k, m: (0, 0)),      # b1
            ],
            out_specs=[
                pl.BlockSpec((tile_n, h_pad_dim), lambda i, k, m: (i, 0)),
                pl.BlockSpec((1, 8, h_pad_dim), lambda i, k, m: (i, 0, 0)),
            ],
            scratch_shapes=[pltpu.VMEM((tile_n, d_pad), f32)],
        ),
        compiler_params=pltpu.CompilerParams(
            dimension_semantics=("parallel", "arbitrary"),
            vmem_limit_bytes=vmem_limit),
    )(block_mask, eps, adj_mm, h_mm, h_p, w1_mm, b1_p)

    scale1, shift1 = _bn_scale_shift(
        stats1, n, _pad1d(params["bn1_gamma"], h_pad_dim), _pad1d(params["bn1_beta"], h_pad_dim))

    # ---------------- pass 2: BN1 + ReLU + linear2 + BN2 moments ----------------
    a2_p, stats2 = pl.pallas_call(
        functools.partial(_bn1_linear2_kernel, n_real=n, tile_n=tile_n),
        out_shape=(jax.ShapeDtypeStruct((np_, o_pad), f32),
                   jax.ShapeDtypeStruct((nr, 8, o_pad), f32)),
        grid_spec=pltpu.PrefetchScalarGridSpec(
            num_scalar_prefetch=0,
            grid=(nr,),
            in_specs=[
                pl.BlockSpec((1, h_pad_dim), lambda i: (0, 0)),      # scale1
                pl.BlockSpec((1, h_pad_dim), lambda i: (0, 0)),      # shift1
                pl.BlockSpec((tile_n, h_pad_dim), lambda i: (i, 0)), # a1 tile
                pl.BlockSpec((o_pad, h_pad_dim), lambda i: (0, 0)),  # W2 [out,in]
                pl.BlockSpec((1, o_pad), lambda i: (0, 0)),          # b2
            ],
            out_specs=[
                pl.BlockSpec((tile_n, o_pad), lambda i: (i, 0)),
                pl.BlockSpec((1, 8, o_pad), lambda i: (i, 0, 0)),
            ],
        ),
        compiler_params=pltpu.CompilerParams(
            dimension_semantics=("parallel",),
            vmem_limit_bytes=vmem_limit),
    )(scale1, shift1, a1_p, w2_mm, b2_p)

    scale2, shift2 = _bn_scale_shift(
        stats2, n, _pad1d(params["bn2_gamma"], o_pad), _pad1d(params["bn2_beta"], o_pad))

    # ---------------- pass 3: BN_node + ReLU + residual ----------------
    hres = h_p if apply_residual else a2_p   # dummy (ignored) when no residual
    out_p = pl.pallas_call(
        functools.partial(_bn2_residual_kernel, apply_residual=apply_residual),
        out_shape=jax.ShapeDtypeStruct((np_, o_pad), h.dtype),
        grid_spec=pltpu.PrefetchScalarGridSpec(
            num_scalar_prefetch=0,
            grid=(nr,),
            in_specs=[
                pl.BlockSpec((1, o_pad), lambda i: (0, 0)),       # scale2
                pl.BlockSpec((1, o_pad), lambda i: (0, 0)),       # shift2
                pl.BlockSpec((tile_n, o_pad), lambda i: (i, 0)),  # a2 tile
                pl.BlockSpec((tile_n, o_pad), lambda i: (i, 0)),  # h residual tile
            ],
            out_specs=pl.BlockSpec((tile_n, o_pad), lambda i: (i, 0)),
        ),
        compiler_params=pltpu.CompilerParams(
            dimension_semantics=("parallel",),
            vmem_limit_bytes=vmem_limit),
    )(scale2, shift2, a2_p, hres)

    return out_p[:n, :out_dim]


# ----------------------------------------------------------------------------- reference
def _bn_train(x, gamma, beta):
    mean = jnp.mean(x, axis=0, keepdims=True)
    var = jnp.maximum(jnp.mean(x * x, axis=0, keepdims=True) - mean * mean, 0.0)
    inv = jax.lax.rsqrt(var + BN_EPS)
    return (x - mean) * inv * gamma + beta


def gin_layer_reference(adj, h, params, *, residual=True, matmul_dtype=jnp.float32):
    """Pure-JAX reference mirroring the PyTorch forward (training-mode BN, p=0 dropout)."""
    def mm(a, b):
        return jnp.dot(a.astype(matmul_dtype), b.astype(matmul_dtype),
                       preferred_element_type=jnp.float32,
                       precision=jax.lax.Precision.HIGHEST)
    z = (1.0 + params["eps"]) * h + mm(adj, h)
    a1 = mm(z, params["w1"].T) + params["b1"]
    h1 = jax.nn.relu(_bn_train(a1, params["bn1_gamma"], params["bn1_beta"]))
    a2 = mm(h1, params["w2"].T) + params["b2"]
    y = jax.nn.relu(_bn_train(a2, params["bn2_gamma"], params["bn2_beta"]))
    if residual and h.shape[1] == params["w2"].shape[0]:
        y = h + y
    return y


# ----------------------------------------------------------------------------- test
if __name__ == "__main__":
    N, IN_DIM, HIDDEN_DIM, OUT_DIM = 200, 32, 64, 32
    TILE_N, TILE_K = 64, 128   # small tiles so the test exercises a multi-tile grid + padding

    key = jax.random.PRNGKey(0)
    k_h, k_w, k_m, k_w1, k_b1, k_w2, k_b2 = jax.random.split(key, 7)

    h = jax.random.normal(k_h, (N, IN_DIM), dtype=jnp.float32)

    # Banded + random sparse weighted adjacency: far-off-diagonal blocks are all-zero,
    # which exercises the block-sparse skip path of the aggregation kernel.
    row = jnp.arange(N)[:, None]
    col = jnp.arange(N)[None, :]
    band = jnp.abs(row - col) <= 40
    rand = jax.random.uniform(k_m, (N, N)) < 0.15
    w = jax.random.uniform(k_w, (N, N), dtype=jnp.float32)
    adj = jnp.where(band & rand, w, 0.0)       # A[v, u] = weight of edge u -> v

    def lin_init(kk, fan_out, fan_in):
        bound = 1.0 / jnp.sqrt(fan_in)
        return jax.random.uniform(kk, (fan_out, fan_in), jnp.float32, -bound, bound)

    params = {
        "eps": jnp.float32(0.0),               # init_eps=0, learn_eps=False
        "w1": lin_init(k_w1, HIDDEN_DIM, IN_DIM),
        "b1": jax.random.uniform(k_b1, (HIDDEN_DIM,), jnp.float32,
                                 -1.0 / jnp.sqrt(IN_DIM), 1.0 / jnp.sqrt(IN_DIM)),
        "bn1_gamma": jnp.ones((HIDDEN_DIM,), jnp.float32),
        "bn1_beta": jnp.zeros((HIDDEN_DIM,), jnp.float32),
        "w2": lin_init(k_w2, OUT_DIM, HIDDEN_DIM),
        "b2": jax.random.uniform(k_b2, (OUT_DIM,), jnp.float32,
                                 -1.0 / jnp.sqrt(HIDDEN_DIM), 1.0 / jnp.sqrt(HIDDEN_DIM)),
        "bn2_gamma": jnp.ones((OUT_DIM,), jnp.float32),
        "bn2_beta": jnp.zeros((OUT_DIM,), jnp.float32),
    }

    fwd_bf16 = jax.jit(functools.partial(gin_layer_forward, residual=True,
                                         matmul_dtype=jnp.bfloat16,
                                         tile_n=TILE_N, tile_k=TILE_K))
    fwd_f32 = jax.jit(functools.partial(gin_layer_forward, residual=True,
                                        matmul_dtype=jnp.float32,
                                        tile_n=TILE_N, tile_k=TILE_K))

    out_bf = jax.block_until_ready(fwd_bf16(adj, h, params))
    out_f32 = jax.block_until_ready(fwd_f32(adj, h, params))

    ref_bf = gin_layer_reference(adj, h, params, residual=True, matmul_dtype=jnp.bfloat16)
    ref_f32 = gin_layer_reference(adj, h, params, residual=True, matmul_dtype=jnp.float32)

    assert out_bf.shape == (N, OUT_DIM)
    assert out_f32.shape == (N, OUT_DIM)
    assert jnp.allclose(out_f32, ref_f32, atol=2e-4, rtol=2e-4), "f32 kernel/reference mismatch"
    assert jnp.allclose(out_bf, ref_bf, atol=1e-2, rtol=1e-2), "bf16 kernel/reference mismatch"

    print("KERNEL_OK")
</pallas_src>

<mosaic_0001>
module attributes {stable_mosaic.version = 11 : i64} {
  func.func @_agg_linear1_kernel(%arg0: i32, %arg1: i32, %arg2: memref<4x2xi32, #tpu.memory_space<smem>>, %arg3: memref<1xf32, #tpu.memory_space<smem>>, %arg4: memref<64x128xbf16, #tpu.memory_space<vmem>>, %arg5: memref<128x128xbf16, #tpu.memory_space<vmem>>, %arg6: memref<64x128xf32, #tpu.memory_space<vmem>>, %arg7: memref<128x128xbf16, #tpu.memory_space<vmem>>, %arg8: memref<1x128xf32, #tpu.memory_space<vmem>>, %arg9: memref<64x128xf32, #tpu.memory_space<vmem>>, %arg10: memref<1x8x128xf32, #tpu.memory_space<vmem>>, %arg11: memref<64x128xf32, #tpu.memory_space<vmem>>) attributes {dimension_semantics = [#tpu.dimension_semantics<parallel>, #tpu.dimension_semantics<arbitrary>], iteration_bounds = array<i64: 4, 2>, scalar_prefetch = 1 : i64, scratch_operands = 1 : i64, tpu.core_type = #tpu.core_type<tc>, window_params = [{transform_indices = @transform_0, window_bounds = array<i64: 1>}, {transform_indices = @transform_1, window_bounds = array<i64: 64, 128>}, {transform_indices = @transform_2, window_bounds = array<i64: 128, 128>}, {transform_indices = @transform_3, window_bounds = array<i64: 64, 128>}, {pipeline_mode = #tpu.pipeline_mode<synchronous>, transform_indices = @transform_4, window_bounds = array<i64: 128, 128>}, {pipeline_mode = #tpu.pipeline_mode<synchronous>, transform_indices = @transform_5, window_bounds = array<i64: 1, 128>}, {transform_indices = @transform_6, window_bounds = array<i64: 64, 128>}, {transform_indices = @transform_7, window_bounds = array<i64: 1, 8, 128>}]} {
    %c0_i32 = arith.constant 0 : i32
    %0 = arith.cmpi eq, %arg1, %c0_i32 : i32
    %1 = arith.extui %0 : i1 to i32
    %c0_i32_0 = arith.constant 0 : i32
    %2 = arith.cmpi ne, %1, %c0_i32_0 : i32
    scf.if %2 {
      %cst = arith.constant 0.000000e+00 : f32
      %12 = vector.broadcast %cst : f32 to vector<64x128xf32>
      %c0 = arith.constant 0 : index
      %c0_4 = arith.constant 0 : index
      %13 = vector.load %arg11[%c0, %c0_4] : memref<64x128xf32, #tpu.memory_space<vmem>>, vector<64x128xf32>
      tpu.vector_store %arg11[%c0, %c0_4], %12 {strides = array<i32>} : memref<64x128xf32, #tpu.memory_space<vmem>>, vector<64x128xf32>,
    } else {
    }
    %3 = arith.index_cast %arg0 : i32 to index
    %4 = arith.index_cast %arg1 : i32 to index
    %5 = memref.load %arg2[%3, %4] : memref<4x2xi32, #tpu.memory_space<smem>>
    %c0_i32_1 = arith.constant 0 : i32
    %6 = arith.cmpi ne, %5, %c0_i32_1 : i32
    %7 = arith.extui %6 : i1 to i32
    %c0_i32_2 = arith.constant 0 : i32
    %8 = arith.cmpi ne, %7, %c0_i32_2 : i32
    scf.if %8 {
      %c0 = arith.constant 0 : index
      %c0_4 = arith.constant 0 : index
      %12 = vector.load %arg11[%c0, %c0_4] : memref<64x128xf32, #tpu.memory_space<vmem>>, vector<64x128xf32>
      %c0_5 = arith.constant 0 : index
      %c0_6 = arith.constant 0 : index
      %13 = vector.load %arg4[%c0_5, %c0_6] : memref<64x128xbf16, #tpu.memory_space<vmem>>, vector<64x128xbf16>
      %c0_7 = arith.constant 0 : index
      %c0_8 = arith.constant 0 : index
      %14 = vector.load %arg5[%c0_7, %c0_8] : memref<128x128xbf16, #tpu.memory_space<vmem>>, vector<128x128xbf16>
      %cst = arith.constant dense<0.000000e+00> : vector<64x128xf32>
      %15 = tpu.matmul %13, %14, %cst {dimension_numbers = #tpu.dot_dimension_numbers<[1], [0], [0], [1], [0, 0, 1, 1], [], []>} : vector<64x128xbf16>, vector<128x128xbf16>, vector<64x128xf32> -> vector<64x128xf32>
      %16 = arith.addf %12, %15 : vector<64x128xf32>
      %c0_9 = arith.constant 0 : index
      %c0_10 = arith.constant 0 : index
      %17 = vector.load %arg11[%c0_9, %c0_10] : memref<64x128xf32, #tpu.memory_space<vmem>>, vector<64x128xf32>
      tpu.vector_store %arg11[%c0_9, %c0_10], %16 {strides = array<i32>} : memref<64x128xf32, #tpu.memory_space<vmem>>, vector<64x128xf32>,
    } else {
    }
    %c1_i32 = arith.constant 1 : i32
    %9 = arith.cmpi eq, %arg1, %c1_i32 : i32
    %10 = arith.extui %9 : i1 to i32
    %c0_i32_3 = arith.constant 0 : i32
    %11 = arith.cmpi ne, %10, %c0_i32_3 : i32
    scf.if %11 {
      %c0 = arith.constant 0 : index
      %12 = memref.load %arg3[%c0] : memref<1xf32, #tpu.memory_space<smem>>
      %cst = arith.constant 1.000000e+00 : f32
      %13 = arith.addf %cst, %12 : f32
      %c0_4 = arith.constant 0 : index
      %c0_5 = arith.constant 0 : index
      %14 = vector.load %arg6[%c0_4, %c0_5] : memref<64x128xf32, #tpu.memory_space<vmem>>, vector<64x128xf32>
      %15 = vector.broadcast %13 : f32 to vector<64x128xf32>
      %16 = arith.mulf %15, %14 : vector<64x128xf32>
      %c0_6 = arith.constant 0 : index
      %c0_7 = arith.constant 0 : index
      %17 = vector.load %arg11[%c0_6, %c0_7] : memref<64x128xf32, #tpu.memory_space<vmem>>, vector<64x128xf32>
      %18 = arith.addf %16, %17 : vector<64x128xf32>
      %19 = arith.truncf %18 : vector<64x128xf32> to vector<64x128xbf16>
      %c0_8 = arith.constant 0 : index
      %c0_9 = arith.constant 0 : index
      %20 = vector.load %arg7[%c0_8, %c0_9] : memref<128x128xbf16, #tpu.memory_space<vmem>>, vector<128x128xbf16>
      %21 = tpu.transpose %20, [1, 0] : vector<128x128xbf16> -> vector<128x128xbf16>
      %cst_10 = arith.constant dense<0.000000e+00> : vector<64x128xf32>
      %22 = tpu.matmul %19, %21, %cst_10 {dimension_numbers = #tpu.dot_dimension_numbers<[1], [0], [0], [1], [0, 0, 1, 1], [], []>} : vector<64x128xbf16>, vector<128x128xbf16>, vector<64x128xf32> -> vector<64x128xf32>
      %c0_11 = arith.constant 0 : index
      %c0_12 = arith.constant 0 : index
      %23 = vector.load %arg8[%c0_11, %c0_12] : memref<1x128xf32, #tpu.memory_space<vmem>>, vector<1x128xf32>
      %24 = vector.broadcast %23 : vector<1x128xf32> to vector<64x128xf32>
      %25 = arith.addf %22, %24 : vector<64x128xf32>
      %c0_13 = arith.constant 0 : index
      %c0_14 = arith.constant 0 : index
      %26 = vector.load %arg9[%c0_13, %c0_14] : memref<64x128xf32, #tpu.memory_space<vmem>>, vector<64x128xf32>
      tpu.vector_store %arg9[%c0_13, %c0_14], %25 {strides = array<i32>} : memref<64x128xf32, #tpu.memory_space<vmem>>, vector<64x128xf32>,
      %c64_i32 = arith.constant 64 : i32
      %27 = arith.muli %arg0, %c64_i32 : i32
      %28 = tpu.iota {dimensions = array<i32: 0>} : vector<64x128xi32>
      %29 = vector.broadcast %27 : i32 to vector<64x128xi32>
      %30 = arith.addi %28, %29 : vector<64x128xi32>
      %c200_i32 = arith.constant 200 : i32
      %31 = vector.broadcast %c200_i32 : i32 to vector<64x128xi32>
      %32 = arith.cmpi slt, %30, %31 : vector<64x128xi32>
      %33 = arith.extui %32 : vector<64x128xi1> to vector<64x128xi32>
      %34 = arith.sitofp %33 : vector<64x128xi32> to vector<64x128xf32>
      %35 = arith.mulf %25, %34 : vector<64x128xf32>
      %cst_15 = arith.constant dense<0.000000e+00> : vector<128xf32>
      %36 = vector.multi_reduction <add>, %35, %cst_15 [0] : vector<64x128xf32> to vector<128xf32>
      %37 = vector.shape_cast %36 : vector<128xf32> to vector<1x128xf32>
      %38 = arith.mulf %35, %35 : vector<64x128xf32>
      %cst_16 = arith.constant dense<0.000000e+00> : vector<128xf32>
      %39 = vector.multi_reduction <add>, %38, %cst_16 [0] : vector<64x128xf32> to vector<128xf32>
      %40 = vector.shape_cast %39 : vector<128xf32> to vector<1x128xf32>
      %41 = tpu.iota {dimensions = array<i32: 0>} : vector<8x128xi32>
      %c0_i32_17 = arith.constant 0 : i32
      %42 = vector.broadcast %c0_i32_17 : i32 to vector<8x128xi32>
      %43 = arith.cmpi eq, %41, %42 : vector<8x128xi32>
      %cst_18 = arith.constant 0.000000e+00 : f32
      %44 = vector.shape_cast %37 : vector<1x128xf32> to vector<1x128xf32>
      %45 = vector.broadcast %44 : vector<1x128xf32> to vector<8x128xf32>
      %46 = vector.broadcast %cst_18 : f32 to vector<8x128xf32>
      %47 = arith.select %43, %45, %46 : vector<8x128xi1>, vector<8x128xf32>
      %c1_i32_19 = arith.constant 1 : i32
      %48 = vector.broadcast %c1_i32_19 : i32 to vector<8x128xi32>
      %49 = arith.cmpi eq, %41, %48 : vector<8x128xi32>
      %cst_20 = arith.constant 0.000000e+00 : f32
      %50 = vector.shape_cast %40 : vector<1x128xf32> to vector<1x128xf32>
      %51 = vector.broadcast %50 : vector<1x128xf32> to vector<8x128xf32>
      %52 = vector.broadcast %cst_20 : f32 to vector<8x128xf32>
      %53 = arith.select %49, %51, %52 : vector<8x128xi1>, vector<8x128xf32>
      %54 = arith.addf %47, %53 : vector<8x128xf32>
      %c0_21 = arith.constant 0 : index
      %c0_22 = arith.constant 0 : index
      %c0_23 = arith.constant 0 : index
      %55 = vector.load %arg10[%c0_21, %c0_22, %c0_23] : memref<1x8x128xf32, #tpu.memory_space<vmem>>, vector<1x8x128xf32>
      %56 = vector.shape_cast %55 : vector<1x8x128xf32> to vector<8x128xf32>
      %57 = vector.shape_cast %54 : vector<8x128xf32> to vector<1x8x128xf32>
      tpu.vector_store %arg10[%c0_21, %c0_22, %c0_23], %57 {strides = array<i32>} : memref<1x8x128xf32, #tpu.memory_space<vmem>>, vector<1x8x128xf32>,
    } else {
    }
    return
  }
  func.func @transform_0(%arg0: i32, %arg1: i32, %arg2: memref<4x2xi32, #tpu.memory_space<smem>>) -> i32 {
    %c0_i32 = arith.constant 0 : i32
    %c0_i32_0 = arith.constant 0 : i32
    return %c0_i32 : i32
  }
  func.func @transform_1(%arg0: i32, %arg1: i32, %arg2: memref<4x2xi32, #tpu.memory_space<smem>>) -> (i32, i32) {
    %c0_i32 = arith.constant 0 : i32
    return %arg0, %arg1 : i32, i32
  }
  func.func @transform_2(%arg0: i32, %arg1: i32, %arg2: memref<4x2xi32, #tpu.memory_space<smem>>) -> (i32, i32) {
    %c0_i32 = arith.constant 0 : i32
    %c0_i32_0 = arith.constant 0 : i32
    return %arg1, %c0_i32 : i32, i32
  }
  func.func @transform_3(%arg0: i32, %arg1: i32, %arg2: memref<4x2xi32, #tpu.memory_space<smem>>) -> (i32, i32) {
    %c0_i32 = arith.constant 0 : i32
    %c0_i32_0 = arith.constant 0 : i32
    return %arg0, %c0_i32 : i32, i32
  }
  func.func @transform_4(%arg0: i32, %arg1: i32, %arg2: memref<4x2xi32, #tpu.memory_space<smem>>) -> (i32, i32) {
    %c0_i32 = arith.constant 0 : i32
    %c0_i32_0 = arith.constant 0 : i32
    %c0_i32_1 = arith.constant 0 : i32
    return %c0_i32, %c0_i32_0 : i32, i32
  }
  func.func @transform_5(%arg0: i32, %arg1: i32, %arg2: memref<4x2xi32, #tpu.memory_space<smem>>) -> (i32, i32) {
    %c0_i32 = arith.constant 0 : i32
    %c0_i32_0 = arith.constant 0 : i32
    %c0_i32_1 = arith.constant 0 : i32
    return %c0_i32, %c0_i32_0 : i32, i32
  }
  func.func @transform_6(%arg0: i32, %arg1: i32, %arg2: memref<4x2xi32, #tpu.memory_space<smem>>) -> (i32, i32) {
    %c0_i32 = arith.constant 0 : i32
    %c0_i32_0 = arith.constant 0 : i32
    return %arg0, %c0_i32 : i32, i32
  }
  func.func @transform_7(%arg0: i32, %arg1: i32, %arg2: memref<4x2xi32, #tpu.memory_space<smem>>) -> (i32, i32, i32) {
    %c0_i32 = arith.constant 0 : i32
    %c0_i32_0 = arith.constant 0 : i32
    %c0_i32_1 = arith.constant 0 : i32
    return %arg0, %c0_i32, %c0_i32_0 : i32, i32, i32
  }
}

module attributes {stable_mosaic.version = 11 : i64} {
  func.func @_bn2_residual_kernel(%arg0: i32, %arg1: memref<1x128xf32, #tpu.memory_space<vmem>>, %arg2: memref<1x128xf32, #tpu.memory_space<vmem>>, %arg3: memref<64x128xf32, #tpu.memory_space<vmem>>, %arg4: memref<64x128xf32, #tpu.memory_space<vmem>>, %arg5: memref<64x128xf32, #tpu.memory_space<vmem>>) attributes {dimension_semantics = [#tpu.dimension_semantics<parallel>], iteration_bounds = array<i64: 4>, scalar_prefetch = 0 : i64, scratch_operands = 0 : i64, tpu.core_type = #tpu.core_type<tc>, window_params = [{pipeline_mode = #tpu.pipeline_mode<synchronous>, transform_indices = @transform_0, window_bounds = array<i64: 1, 128>}, {pipeline_mode = #tpu.pipeline_mode<synchronous>, transform_indices = @transform_1, window_bounds = array<i64: 1, 128>}, {transform_indices = @transform_2, window_bounds = array<i64: 64, 128>}, {transform_indices = @transform_3, window_bounds = array<i64: 64, 128>}, {transform_indices = @transform_4, window_bounds = array<i64: 64, 128>}]} {
    %c0 = arith.constant 0 : index
    %c0_0 = arith.constant 0 : index
    %0 = vector.load %arg3[%c0, %c0_0] : memref<64x128xf32, #tpu.memory_space<vmem>>, vector<64x128xf32>
    %c0_1 = arith.constant 0 : index
    %c0_2 = arith.constant 0 : index
    %1 = vector.load %arg1[%c0_1, %c0_2] : memref<1x128xf32, #tpu.memory_space<vmem>>, vector<1x128xf32>
    %2 = vector.broadcast %1 : vector<1x128xf32> to vector<64x128xf32>
    %3 = arith.mulf %0, %2 : vector<64x128xf32>
    %c0_3 = arith.constant 0 : index
    %c0_4 = arith.constant 0 : index
    %4 = vector.load %arg2[%c0_3, %c0_4] : memref<1x128xf32, #tpu.memory_space<vmem>>, vector<1x128xf32>
    %5 = vector.broadcast %4 : vector<1x128xf32> to vector<64x128xf32>
    %6 = arith.addf %3, %5 : vector<64x128xf32>
    %cst = arith.constant 0.000000e+00 : f32
    %7 = vector.broadcast %cst : f32 to vector<64x128xf32>
    %8 = arith.maximumf %6, %7 : vector<64x128xf32>
    %c0_5 = arith.constant 0 : index
    %c0_6 = arith.constant 0 : index
    %9 = vector.load %arg4[%c0_5, %c0_6] : memref<64x128xf32, #tpu.memory_space<vmem>>, vector<64x128xf32>
    %10 = arith.addf %9, %8 : vector<64x128xf32>
    %c0_7 = arith.constant 0 : index
    %c0_8 = arith.constant 0 : index
    %11 = vector.load %arg5[%c0_7, %c0_8] : memref<64x128xf32, #tpu.memory_space<vmem>>, vector<64x128xf32>
    tpu.vector_store %arg5[%c0_7, %c0_8], %10 {strides = array<i32>} : memref<64x128xf32, #tpu.memory_space<vmem>>, vector<64x128xf32>,
    return
  }
  func.func @transform_0(%arg0: i32) -> (i32, i32) {
    %c0_i32 = arith.constant 0 : i32
    %c0_i32_0 = arith.constant 0 : i32
    %c0_i32_1 = arith.constant 0 : i32
    return %c0_i32, %c0_i32_0 : i32, i32
  }
  func.func @transform_1(%arg0: i32) -> (i32, i32) {
    %c0_i32 = arith.constant 0 : i32
    %c0_i32_0 = arith.constant 0 : i32
    %c0_i32_1 = arith.constant 0 : i32
    return %c0_i32, %c0_i32_0 : i32, i32
  }
  func.func @transform_2(%arg0: i32) -> (i32, i32) {
    %c0_i32 = arith.constant 0 : i32
    %c0_i32_0 = arith.constant 0 : i32
    return %arg0, %c0_i32 : i32, i32
  }
  func.func @transform_3(%arg0: i32) -> (i32, i32) {
    %c0_i32 = arith.constant 0 : i32
    %c0_i32_0 = arith.constant 0 : i32
    return %arg0, %c0_i32 : i32, i32
  }
  func.func @transform_4(%arg0: i32) -> (i32, i32) {
    %c0_i32 = arith.constant 0 : i32
    %c0_i32_0 = arith.constant 0 : i32
    return %arg0, %c0_i32 : i32, i32
  }
}

module attributes {stable_mosaic.version = 11 : i64} {
  func.func @_bn1_linear2_kernel(%arg0: i32, %arg1: memref<1x128xf32, #tpu.memory_space<vmem>>, %arg2: memref<1x128xf32, #tpu.memory_space<vmem>>, %arg3: memref<64x128xf32, #tpu.memory_space<vmem>>, %arg4: memref<128x128xbf16, #tpu.memory_space<vmem>>, %arg5: memref<1x128xf32, #tpu.memory_space<vmem>>, %arg6: memref<64x128xf32, #tpu.memory_space<vmem>>, %arg7: memref<1x8x128xf32, #tpu.memory_space<vmem>>) attributes {dimension_semantics = [#tpu.dimension_semantics<parallel>], iteration_bounds = array<i64: 4>, scalar_prefetch = 0 : i64, scratch_operands = 0 : i64, tpu.core_type = #tpu.core_type<tc>, window_params = [{pipeline_mode = #tpu.pipeline_mode<synchronous>, transform_indices = @transform_0, window_bounds = array<i64: 1, 128>}, {pipeline_mode = #tpu.pipeline_mode<synchronous>, transform_indices = @transform_1, window_bounds = array<i64: 1, 128>}, {transform_indices = @transform_2, window_bounds = array<i64: 64, 128>}, {pipeline_mode = #tpu.pipeline_mode<synchronous>, transform_indices = @transform_3, window_bounds = array<i64: 128, 128>}, {pipeline_mode = #tpu.pipeline_mode<synchronous>, transform_indices = @transform_4, window_bounds = array<i64: 1, 128>}, {transform_indices = @transform_5, window_bounds = array<i64: 64, 128>}, {transform_indices = @transform_6, window_bounds = array<i64: 1, 8, 128>}]} {
    %c0 = arith.constant 0 : index
    %c0_0 = arith.constant 0 : index
    %0 = vector.load %arg3[%c0, %c0_0] : memref<64x128xf32, #tpu.memory_space<vmem>>, vector<64x128xf32>
    %c0_1 = arith.constant 0 : index
    %c0_2 = arith.constant 0 : index
    %1 = vector.load %arg1[%c0_1, %c0_2] : memref<1x128xf32, #tpu.memory_space<vmem>>, vector<1x128xf32>
    %2 = vector.broadcast %1 : vector<1x128xf32> to vector<64x128xf32>
    %3 = arith.mulf %0, %2 : vector<64x128xf32>
    %c0_3 = arith.constant 0 : index
    %c0_4 = arith.constant 0 : index
    %4 = vector.load %arg2[%c0_3, %c0_4] : memref<1x128xf32, #tpu.memory_space<vmem>>, vector<1x128xf32>
    %5 = vector.broadcast %4 : vector<1x128xf32> to vector<64x128xf32>
    %6 = arith.addf %3, %5 : vector<64x128xf32>
    %cst = arith.constant 0.000000e+00 : f32
    %7 = vector.broadcast %cst : f32 to vector<64x128xf32>
    %8 = arith.maximumf %6, %7 : vector<64x128xf32>
    %9 = arith.truncf %8 : vector<64x128xf32> to vector<64x128xbf16>
    %c0_5 = arith.constant 0 : index
    %c0_6 = arith.constant 0 : index
    %10 = vector.load %arg4[%c0_5, %c0_6] : memref<128x128xbf16, #tpu.memory_space<vmem>>, vector<128x128xbf16>
    %11 = tpu.transpose %10, [1, 0] : vector<128x128xbf16> -> vector<128x128xbf16>
    %cst_7 = arith.constant dense<0.000000e+00> : vector<64x128xf32>
    %12 = tpu.matmul %9, %11, %cst_7 {dimension_numbers = #tpu.dot_dimension_numbers<[1], [0], [0], [1], [0, 0, 1, 1], [], []>} : vector<64x128xbf16>, vector<128x128xbf16>, vector<64x128xf32> -> vector<64x128xf32>
    %c0_8 = arith.constant 0 : index
    %c0_9 = arith.constant 0 : index
    %13 = vector.load %arg5[%c0_8, %c0_9] : memref<1x128xf32, #tpu.memory_space<vmem>>, vector<1x128xf32>
    %14 = vector.broadcast %13 : vector<1x128xf32> to vector<64x128xf32>
    %15 = arith.addf %12, %14 : vector<64x128xf32>
    %c0_10 = arith.constant 0 : index
    %c0_11 = arith.constant 0 : index
    %16 = vector.load %arg6[%c0_10, %c0_11] : memref<64x128xf32, #tpu.memory_space<vmem>>, vector<64x128xf32>
    tpu.vector_store %arg6[%c0_10, %c0_11], %15 {strides = array<i32>} : memref<64x128xf32, #tpu.memory_space<vmem>>, vector<64x128xf32>,
    %c64_i32 = arith.constant 64 : i32
    %17 = arith.muli %arg0, %c64_i32 : i32
    %18 = tpu.iota {dimensions = array<i32: 0>} : vector<64x128xi32>
    %19 = vector.broadcast %17 : i32 to vector<64x128xi32>
    %20 = arith.addi %18, %19 : vector<64x128xi32>
    %c200_i32 = arith.constant 200 : i32
    %21 = vector.broadcast %c200_i32 : i32 to vector<64x128xi32>
    %22 = arith.cmpi slt, %20, %21 : vector<64x128xi32>
    %23 = arith.extui %22 : vector<64x128xi1> to vector<64x128xi32>
    %24 = arith.sitofp %23 : vector<64x128xi32> to vector<64x128xf32>
    %25 = arith.mulf %15, %24 : vector<64x128xf32>
    %cst_12 = arith.constant dense<0.000000e+00> : vector<128xf32>
    %26 = vector.multi_reduction <add>, %25, %cst_12 [0] : vector<64x128xf32> to vector<128xf32>
    %27 = vector.shape_cast %26 : vector<128xf32> to vector<1x128xf32>
    %28 = arith.mulf %25, %25 : vector<64x128xf32>
    %cst_13 = arith.constant dense<0.000000e+00> : vector<128xf32>
    %29 = vector.multi_reduction <add>, %28, %cst_13 [0] : vector<64x128xf32> to vector<128xf32>
    %30 = vector.shape_cast %29 : vector<128xf32> to vector<1x128xf32>
    %31 = tpu.iota {dimensions = array<i32: 0>} : vector<8x128xi32>
    %c0_i32 = arith.constant 0 : i32
    %32 = vector.broadcast %c0_i32 : i32 to vector<8x128xi32>
    %33 = arith.cmpi eq, %31, %32 : vector<8x128xi32>
    %cst_14 = arith.constant 0.000000e+00 : f32
    %34 = vector.shape_cast %27 : vector<1x128xf32> to vector<1x128xf32>
    %35 = vector.broadcast %34 : vector<1x128xf32> to vector<8x128xf32>
    %36 = vector.broadcast %cst_14 : f32 to vector<8x128xf32>
    %37 = arith.select %33, %35, %36 : vector<8x128xi1>, vector<8x128xf32>
    %c1_i32 = arith.constant 1 : i32
    %38 = vector.broadcast %c1_i32 : i32 to vector<8x128xi32>
    %39 = arith.cmpi eq, %31, %38 : vector<8x128xi32>
    %cst_15 = arith.constant 0.000000e+00 : f32
    %40 = vector.shape_cast %30 : vector<1x128xf32> to vector<1x128xf32>
    %41 = vector.broadcast %40 : vector<1x128xf32> to vector<8x128xf32>
    %42 = vector.broadcast %cst_15 : f32 to vector<8x128xf32>
    %43 = arith.select %39, %41, %42 : vector<8x128xi1>, vector<8x128xf32>
    %44 = arith.addf %37, %43 : vector<8x128xf32>
    %c0_16 = arith.constant 0 : index
    %c0_17 = arith.constant 0 : index
    %c0_18 = arith.constant 0 : index
    %45 = vector.load %arg7[%c0_16, %c0_17, %c0_18] : memref<1x8x128xf32, #tpu.memory_space<vmem>>, vector<1x8x128xf32>
    %46 = vector.shape_cast %45 : vector<1x8x128xf32> to vector<8x128xf32>
    %47 = vector.shape_cast %44 : vector<8x128xf32> to vector<1x8x128xf32>
    tpu.vector_store %arg7[%c0_16, %c0_17, %c0_18], %47 {strides = array<i32>} : memref<1x8x128xf32, #tpu.memory_space<vmem>>, vector<1x8x128xf32>,
    return
  }
  func.func @transform_0(%arg0: i32) -> (i32, i32) {
    %c0_i32 = arith.constant 0 : i32
    %c0_i32_0 = arith.constant 0 : i32
    %c0_i32_1 = arith.constant 0 : i32
    return %c0_i32, %c0_i32_0 : i32, i32
  }
  func.func @transform_1(%arg0: i32) -> (i32, i32) {
    %c0_i32 = arith.constant 0 : i32
    %c0_i32_0 = arith.constant 0 : i32
    %c0_i32_1 = arith.constant 0 : i32
    return %c0_i32, %c0_i32_0 : i32, i32
  }
  func.func @transform_2(%arg0: i32) -> (i32, i32) {
    %c0_i32 = arith.constant 0 : i32
    %c0_i32_0 = arith.constant 0 : i32
    return %arg0, %c0_i32 : i32, i32
  }
  func.func @transform_3(%arg0: i32) -> (i32, i32) {
    %c0_i32 = arith.constant 0 : i32
    %c0_i32_0 = arith.constant 0 : i32
    %c0_i32_1 = arith.constant 0 : i32
    return %c0_i32, %c0_i32_0 : i32, i32
  }
  func.func @transform_4(%arg0: i32) -> (i32, i32) {
    %c0_i32 = arith.constant 0 : i32
    %c0_i32_0 = arith.constant 0 : i32
    %c0_i32_1 = arith.constant 0 : i32
    return %c0_i32, %c0_i32_0 : i32, i32
  }
  func.func @transform_5(%arg0: i32) -> (i32, i32) {
    %c0_i32 = arith.constant 0 : i32
    %c0_i32_0 = arith.constant 0 : i32
    return %arg0, %c0_i32 : i32, i32
  }
  func.func @transform_6(%arg0: i32) -> (i32, i32, i32) {
    %c0_i32 = arith.constant 0 : i32
    %c0_i32_0 = arith.constant 0 : i32
    %c0_i32_1 = arith.constant 0 : i32
    return %arg0, %c0_i32, %c0_i32_0 : i32, i32, i32
  }
}

</mosaic_0001>

<llo_original>
// kernel: gin_layer_forward.5
$region0: #{gin_layer_forward.5}
  #allocation0 [shape = 'u32[]', space=smem, size = 0x4, offset = 0x4, fixed_abs, tag = 'smem constant byte address 0x4 - core index']
  #allocation1 [shape = 'u32[144,128]{1,0:T(1,128)}', space=vmem, size = 0x12000, scoped, tag = 'internal scratch']
  %s0 = inlined_call_operand.vmem [shape: f32[1,128], index: 0, kind: input, shape index: {}]
  %s1 = inlined_call_operand.vmem [shape: f32[1,128], index: 1, kind: input, shape index: {}]
  %s2 = inlined_call_operand.vmem [shape: f32[256,128], index: 2, kind: input, shape index: {}]
  %s3 = inlined_call_operand.vmem [shape: f32[256,128], index: 3, kind: input, shape index: {}]
  %s4 = inlined_call_operand.vmem [shape: f32[256,128], index: 4, kind: output, shape index: {}]
  %s5 = sld [smem:[#allocation0]]
  $region49: #{gin_layer_forward.5} parent=0
    _
  %s7 = ssub.s32 1, %s5
  %s8 = scalar_select 0, %s7, %s5
  loop: start=0, step=1, limit=6
  $region2: #{gin_layer_forward.5} parent=0 // loop_pre_header
    _
  $region3: #{gin_layer_forward.5} parent=0 // loop_header
    %s10 = sphi 0, %s14
    %p11 = scmp.ge.s32.totalorder %s10, 6
    %s18 = sphi 0, %s18
    %s20 = sphi 0, %s18
    %s21 = sphi 0, %s20
    %s35 = sphi 0, %s21
    %s39 = sphi 0, %s39
    %s41 = sphi 0, %s39
    %s42 = sphi 0, %s41
    %s56 = sphi 0, %s42
    %s62 = sphi 0, %s64
    %s65 = sphi 0, %s62
    %s66 = sphi 0, %s65
    %s82 = sphi 0, %s66
    %s88 = sphi 0, %s90
    %s91 = sphi 0, %s88
    %s92 = sphi 0, %s91
    %s108 = sphi 0, %s92
    %s114 = sphi 0, %s116
    %s117 = sphi 0, %s114
    %s118 = sphi 0, %s117
    %s134 = sphi 0, %s118
  $region4: #{gin_layer_forward.5} parent=0 // loop_header_branch
    %13 = sbr.rel (%p11) target = $region8
  $region5: #{gin_layer_forward.5} parent=0 // loop_body
    %s15 = ssub.s32 %s10, 1
    %s16 = ssub.s32 %s10, 2
    %s17 = sadd.s32 %s10, 1
    %s19 = sadd.s32 %s18, 1
    %p22 = scmp.eq.s32.totalorder %s10, 3
    %p23 = scmp.ne.s32.totalorder %s18, %s20
    %p24 = scmp.eq.s32.totalorder %s10, 0
    %p25 = por %p23, %p24
    %p26 = scmp.ne.s32.totalorder %s18, %s20
    %p27 = scmp.eq.s32.totalorder %s15, 3
    %p28 = por %p26, %p27
    %p29 = scmp.ne.s32.totalorder %s20, %s21
    %p30 = scmp.eq.s32.totalorder %s15, 0
    %p31 = por %p29, %p30
    %p32 = scmp.ne.s32.totalorder %s20, %s21
    %p33 = scmp.eq.s32.totalorder %s16, 3
    %p34 = por %p32, %p33
    %p36 = scmp.ne.s32.totalorder %s21, %s35
    %p37 = scmp.eq.s32.totalorder %s16, 0
    %p38 = por %p36, %p37
    %s40 = sadd.s32 %s39, 1
    %p43 = scmp.eq.s32.totalorder %s10, 3
    %p44 = scmp.ne.s32.totalorder %s39, %s41
    %p45 = scmp.eq.s32.totalorder %s10, 0
    %p46 = por %p44, %p45
    %p47 = scmp.ne.s32.totalorder %s39, %s41
    %p48 = scmp.eq.s32.totalorder %s15, 3
    %p49 = por %p47, %p48
    %p50 = scmp.ne.s32.totalorder %s41, %s42
    %p51 = scmp.eq.s32.totalorder %s15, 0
    %p52 = por %p50, %p51
    %p53 = scmp.ne.s32.totalorder %s41, %s42
    %p54 = scmp.eq.s32.totalorder %s16, 3
    %p55 = por %p53, %p54
    %p57 = scmp.ne.s32.totalorder %s42, %s56
    %p58 = scmp.eq.s32.totalorder %s16, 0
    %p59 = por %p57, %p58
    %s60 = ssub.s32 %s10, %s17
    %p61 = scmp.eq.s32.totalorder %s60, 0
    %s63 = sadd.s32 %s62, 1
    %s64 = scalar_select %p61, %s62, %s63
    %p67 = pneg %p61
    %p68 = scmp.eq.s32.totalorder %s10, 3
    %p69 = por %p67, %p68
    %p70 = scmp.ne.s32.totalorder %s62, %s65
    %p71 = scmp.eq.s32.totalorder %s10, 0
    %p72 = por %p70, %p71
    %p73 = scmp.ne.s32.totalorder %s62, %s65
    %p74 = scmp.eq.s32.totalorder %s15, 3
    %p75 = por %p73, %p74
    %p76 = scmp.ne.s32.totalorder %s65, %s66
    %p77 = scmp.eq.s32.totalorder %s15, 0
    %p78 = por %p76, %p77
    %p79 = scmp.ne.s32.totalorder %s65, %s66
    %p80 = scmp.eq.s32.totalorder %s16, 3
    %p81 = por %p79, %p80
    %p83 = scmp.ne.s32.totalorder %s66, %s82
    %p84 = scmp.eq.s32.totalorder %s16, 0
    %p85 = por %p83, %p84
    %s86 = ssub.s32 %s10, %s17
    %p87 = scmp.eq.s32.totalorder %s86, 0
    %s89 = sadd.s32 %s88, 1
    %s90 = scalar_select %p87, %s88, %s89
    %p93 = pneg %p87
    %p94 = scmp.eq.s32.totalorder %s10, 3
    %p95 = por %p93, %p94
    %p96 = scmp.ne.s32.totalorder %s88, %s91
    %p97 = scmp.eq.s32.totalorder %s10, 0
    %p98 = por %p96, %p97
    %p99 = scmp.ne.s32.totalorder %s88, %s91
    %p100 = scmp.eq.s32.totalorder %s15, 3
    %p101 = por %p99, %p100
    %p102 = scmp.ne.s32.totalorder %s91, %s92
    %p103 = scmp.eq.s32.totalorder %s15, 0
    %p104 = por %p102, %p103
    %p105 = scmp.ne.s32.totalorder %s91, %s92
    %p106 = scmp.eq.s32.totalorder %s16, 3
    %p107 = por %p105, %p106
    %p109 = scmp.ne.s32.totalorder %s92, %s108
    %p110 = scmp.eq.s32.totalorder %s16, 0
    %p111 = por %p109, %p110
    %s112 = ssub.s32 %s10, %s17
    %p113 = scmp.eq.s32.totalorder %s112, 0
    %s115 = sadd.s32 %s114, 1
    %s116 = scalar_select %p113, %s114, %s115
    %p119 = pneg %p113
    %p120 = scmp.eq.s32.totalorder %s10, 3
    %p121 = por %p119, %p120
    %p122 = scmp.ne.s32.totalorder %s114, %s117
    %p123 = scmp.eq.s32.totalorder %s10, 0
    %p124 = por %p122, %p123
    %p125 = scmp.ne.s32.totalorder %s114, %s117
    %p126 = scmp.eq.s32.totalorder %s15, 3
    %p127 = por %p125, %p126
    %p128 = scmp.ne.s32.totalorder %s117, %s118
    %p129 = scmp.eq.s32.totalorder %s15, 0
    %p130 = por %p128, %p129
    %p131 = scmp.ne.s32.totalorder %s117, %s118
    %p132 = scmp.eq.s32.totalorder %s16, 3
    %p133 = por %p131, %p132
    %p135 = scmp.ne.s32.totalorder %s118, %s134
    %p136 = scmp.eq.s32.totalorder %s16, 0
    %p137 = por %p135, %p136
    %p138 = scmp.le.s32.totalorder 1, %s10
    %p139 = scmp.lt.s32.totalorder %s10, 5
    %p140 = pnand %p138, %p139
    %p141 = pneg %p140
    // Predicated region
    $region9: #{gin_layer_forward.5} parent=5 // pred_check
      _
    $region10: #{gin_layer_forward.5} parent=5 // pred_check_branch
      %143 = sbr.rel (%p140) target = $region12
    $region11: #{gin_layer_forward.5} parent=5 // pred_region
      %s144 = ssub.s32 %s10, 1
      // Predicated region
      $region13: #{gin_layer_forward.5} parent=11 // pred_check
        %p145 = pneg %p31
      $region14: #{gin_layer_forward.5} parent=11 // pred_check_branch
        %147 = sbr.rel (%p145) target = $region16
      $region15: #{gin_layer_forward.5} parent=11 // pred_region
        _
      $region16: #{gin_layer_forward.5} parent=11 // pred_fallthru
        _
      // Predicated region
      $region17: #{gin_layer_forward.5} parent=11 // pred_check
        %p148 = pneg %p52
      $region18: #{gin_layer_forward.5} parent=11 // pred_check_branch
        %150 = sbr.rel (%p148) target = $region20
      $region19: #{gin_layer_forward.5} parent=11 // pred_region
        _
      $region20: #{gin_layer_forward.5} parent=11 // pred_fallthru
        _
    $region12: #{gin_layer_forward.5} parent=5 // pred_fallthru
      _
    %p151 = scmp.lt.s32.totalorder %s10, 4
    // Predicated region
    $region21: #{gin_layer_forward.5} parent=5 // pred_check
      %p152 = pneg %p151
    $region22: #{gin_layer_forward.5} parent=5 // pred_check_branch
      %154 = sbr.rel (%p152) target = $region24
    $region23: #{gin_layer_forward.5} parent=5 // pred_region
      // Predicated region
      $region25: #{gin_layer_forward.5} parent=23 // pred_check
        %p155 = pneg %p72
      $region26: #{gin_layer_forward.5} parent=23 // pred_check_branch
        %157 = sbr.rel (%p155) target = $region28
      $region27: #{gin_layer_forward.5} parent=23 // pred_region
        %s158 = smul.u32 8, %s10
        %p159 = scmp.lt.s32.totalorder %s158, 31
        %s160 = scalar_select %p159, %s158, 31
        %s161 = smul.addr %s160, 8
        %s162 = scalar_lea.vmem %s2, %s161
        %s163 = smul.u32 8, %s10
      $region28: #{gin_layer_forward.5} parent=23 // pred_fallthru
        _
      // Predicated region
      $region29: #{gin_layer_forward.5} parent=23 // pred_check
        %p164 = pneg %p98
      $region30: #{gin_layer_forward.5} parent=23 // pred_check_branch
        %166 = sbr.rel (%p164) target = $region32
      $region31: #{gin_layer_forward.5} parent=23 // pred_region
        %s167 = smul.u32 8, %s10
        %p168 = scmp.lt.s32.totalorder %s167, 31
        %s169 = scalar_select %p168, %s167, 31
        %s170 = smul.addr %s169, 8
        %s171 = scalar_lea.vmem %s3, %s170
        %s172 = smul.u32 8, %s10
      $region32: #{gin_layer_forward.5} parent=23 // pred_fallthru
        _
    $region24: #{gin_layer_forward.5} parent=5 // pred_fallthru
      _
    %p173 = scmp.le.s32.totalorder 1, %s10
    %p174 = scmp.lt.s32.totalorder %s10, 5
    %p175 = pnand %p173, %p174
    %p176 = pneg %p175
    // Predicated region
    $region33: #{gin_layer_forward.5} parent=5 // pred_check
      _
    $region34: #{gin_layer_forward.5} parent=5 // pred_check_branch
      %178 = sbr.rel (%p175) target = $region36
    $region35: #{gin_layer_forward.5} parent=5 // pred_region
      %s179 = ssub.s32 %s10, 1
      %p180 = pneg %p31
      %p181 = pneg %p28
      %p182 = pneg %p52
      %p183 = pneg %p49
      %s184 = smul.u32 8, %s15
      %p185 = scmp.lt.s32.totalorder %s184, 31
      %s186 = scalar_select %p185, %s184, 31
      %s187 = smul.addr %s186, 8
      %s188 = scalar_lea.vmem %s2, %s187
      %p189 = pneg %p78
      %p190 = pneg %p75
      %s191 = smul.u32 8, %s15
      %p192 = scmp.lt.s32.totalorder %s191, 31
      %s193 = scalar_select %p192, %s191, 31
      %s194 = smul.addr %s193, 8
      %s195 = scalar_lea.vmem %s3, %s194
      %p196 = pneg %p104
      %p197 = pneg %p101
      %p198 = pneg %p130
      %p199 = pneg %p127
      %s200 = smul.u32 8, %s15
      %p201 = scmp.lt.s32.totalorder %s200, 31
      %s202 = scalar_select %p201, %s200, 31
      %s203 = smul.addr %s202, 8
      %s204 = scalar_lea.vmem %s4, %s203
      %s205 = smul.u32 8, %s15
      %p206 = scmp.lt.s32.totalorder %s205, 31
      %s207 = scalar_select %p206, %s205, 31
      %s208 = smul.addr %s207, 8
      %s209 = scalar_lea.vmem %s2, %s208
      %s210 = smul.u32 8, %s15
      %s211 = smul.u32 8, %s15
      %p212 = scmp.lt.s32.totalorder %s211, 31
      %s213 = scalar_select %p212, %s211, 31
      %s214 = smul.addr %s213, 8
      %s215 = scalar_lea.vmem %s3, %s214
      %s216 = smul.u32 8, %s15
      %s217 = smul.u32 8, %s15
      %p218 = scmp.lt.s32.totalorder %s217, 31
      %s219 = scalar_select %p218, %s217, 31
      %s220 = smul.addr %s219, 8
      %s221 = scalar_lea.vmem %s4, %s220
      %s222 = smul.u32 8, %s15
      %v223 = vld [vmem:[%s209] sm:$0xff]
      %v224 = vld [vmem:[%s209 + $0x8] sm:$0xff]
      %v225 = vld [vmem:[%s209 + $0x10] sm:$0xff]
      %v226 = vld [vmem:[%s209 + $0x18] sm:$0xff]
      %v227 = vld [vmem:[%s209 + $0x20] sm:$0xff]
      %v228 = vld [vmem:[%s209 + $0x28] sm:$0xff]
      %v229 = vld [vmem:[%s209 + $0x30] sm:$0xff]
      %v230 = vld [vmem:[%s209 + $0x38] sm:$0xff]
      %v231 = vld [vmem:[%s0] sm:$0x1]
      %v233 = vlaneseq
      %v234 = vshrl.u32 %v233, 7
      %v235 = vsub.s32 0, %v234
      %v236 = vrot.slane %v231, %v235
      %v238 = vmul.f32 %v223, %v236
      %v239 = vmul.f32 %v224, %v236
      %v240 = vmul.f32 %v225, %v236
      %v241 = vmul.f32 %v226, %v236
      %v242 = vmul.f32 %v227, %v236
      %v243 = vmul.f32 %v228, %v236
      %v244 = vmul.f32 %v229, %v236
      %v245 = vmul.f32 %v230, %v236
      %v246 = vld [vmem:[%s1] sm:$0x1]
      %v248 = vlaneseq
      %v249 = vshrl.u32 %v248, 7
      %v250 = vsub.s32 0, %v249
      %v251 = vrot.slane %v246, %v250
      %v253 = vadd.f32 %v238, %v251
      %v254 = vadd.f32 %v239, %v251
      %v255 = vadd.f32 %v240, %v251
      %v256 = vadd.f32 %v241, %v251
      %v257 = vadd.f32 %v242, %v251
      %v258 = vadd.f32 %v243, %v251
      %v259 = vadd.f32 %v244, %v251
      %v260 = vadd.f32 %v245, %v251
      %v261 = vmax.f32 %v253, 0.0
      %v262 = vmax.f32 %v254, 0.0
      %v263 = vmax.f32 %v255, 0.0
      %v264 = vmax.f32 %v256, 0.0
      %v265 = vmax.f32 %v257, 0.0
      %v266 = vmax.f32 %v258, 0.0
      %v267 = vmax.f32 %v259, 0.0
      %v268 = vmax.f32 %v260, 0.0
      %v269 = vld [vmem:[%s215] sm:$0xff]
      %v270 = vld [vmem:[%s215 + $0x8] sm:$0xff]
      %v271 = vld [vmem:[%s215 + $0x10] sm:$0xff]
      %v272 = vld [vmem:[%s215 + $0x18] sm:$0xff]
      %v273 = vld [vmem:[%s215 + $0x20] sm:$0xff]
      %v274 = vld [vmem:[%s215 + $0x28] sm:$0xff]
      %v275 = vld [vmem:[%s215 + $0x30] sm:$0xff]
      %v276 = vld [vmem:[%s215 + $0x38] sm:$0xff]
      %v277 = vadd.f32 %v269, %v261
      %v278 = vadd.f32 %v270, %v262
      %v279 = vadd.f32 %v271, %v263
      %v280 = vadd.f32 %v272, %v264
      %v281 = vadd.f32 %v273, %v265
      %v282 = vadd.f32 %v274, %v266
      %v283 = vadd.f32 %v275, %v267
      %v284 = vadd.f32 %v276, %v268
      %285 = vst [vmem:[%s221] sm:$0xff] %v277
      %286 = vst [vmem:[%s221 + $0x8] sm:$0xff] %v278
      %287 = vst [vmem:[%s221 + $0x10] sm:$0xff] %v279
      %288 = vst [vmem:[%s221 + $0x18] sm:$0xff] %v280
      %289 = vst [vmem:[%s221 + $0x20] sm:$0xff] %v281
      %290 = vst [vmem:[%s221 + $0x28] sm:$0xff] %v282
      %291 = vst [vmem:[%s221 + $0x30] sm:$0xff] %v283
      %292 = vst [vmem:[%s221 + $0x38] sm:$0xff] %v284
      %s293 = smul.u32 8, %s15
      %p294 = scmp.lt.s32.totalorder %s293, 31
      %s295 = scalar_select %p294, %s293, 31
      %s296 = smul.addr %s295, 8
      %s297 = scalar_lea.vmem %s4, %s296
      // Predicated region
      $region37: #{gin_layer_forward.5} parent=35 // pred_check
        %p298 = pneg %p127
      $region38: #{gin_layer_forward.5} parent=35 // pred_check_branch
        %300 = sbr.rel (%p298) target = $region40
      $region39: #{gin_layer_forward.5} parent=35 // pred_region
        %s301 = smul.u32 8, %s15
      $region40: #{gin_layer_forward.5} parent=35 // pred_fallthru
        _
    $region36: #{gin_layer_forward.5} parent=5 // pred_fallthru
      _
    %p302 = scmp.le.s32.totalorder 2, %s10
    // Predicated region
    $region41: #{gin_layer_forward.5} parent=5 // pred_check
      %p303 = pneg %p302
    $region42: #{gin_layer_forward.5} parent=5 // pred_check_branch
      %305 = sbr.rel (%p303) target = $region44
    $region43: #{gin_layer_forward.5} parent=5 // pred_region
      %s306 = ssub.s32 %s10, 2
      // Predicated region
      $region45: #{gin_layer_forward.5} parent=43 // pred_check
        %p307 = pneg %p133
      $region46: #{gin_layer_forward.5} parent=43 // pred_check_branch
        %309 = sbr.rel (%p307) target = $region48
      $region47: #{gin_layer_forward.5} parent=43 // pred_region
        %s310 = smul.u32 8, %s16
        %p311 = scmp.lt.s32.totalorder %s310, 31
        %s312 = scalar_select %p311, %s310, 31
        %s313 = smul.addr %s312, 8
        %s314 = scalar_lea.vmem %s4, %s313
      $region48: #{gin_layer_forward.5} parent=43 // pred_fallthru
        _
    $region44: #{gin_layer_forward.5} parent=5 // pred_fallthru
      _
  $region6: #{gin_layer_forward.5} parent=0 // loop_footer
    %s14 = sadd.s32 1, %s10
  $region7: #{gin_layer_forward.5} parent=0 // loop_footer_branch
    %9 = sbr.rel target = $region3
  $region8: #{gin_layer_forward.5} parent=0 // loop_exit
    _

// kernel: gin_layer_forward.3
$region0: #{gin_layer_forward.3}
  #allocation0 [shape = 'u32[]', space=smem, size = 0x4, offset = 0x4, fixed_abs, tag = 'smem constant byte address 0x4 - core index']
  #allocation1 [shape = 'u32[144,128]{1,0:T(1,128)}', space=vmem, size = 0x12000, scoped, tag = 'internal scratch']
  #allocation2 [shape = 'f32[64,128]{1,0:T(8,128)}', space=vmem, size = 0x8000, scoped, tag = 'scratch operand']
  #allocation3 [shape = 's32[1]{0}', space=sflag, size = 0x4, scoped, tag = 'scoped memory for gin_layer_forward.3']
  #allocation4 [shape = 'u8[2048]{0}', space=smem, size = 0x800, scoped, tag = 'prefetched SMEM operand 0']
  #allocation5 [shape = 'f32[1]{0:T(128)S(6)}', space=smem, size = 0x200, scoped, tag = 'scoped memory for gin_layer_forward.3']
  %s0 = inlined_call_operand.vmem [shape: s32[4,2], index: 0, kind: input, shape index: {}]
  %s1 = inlined_call_operand.<no memory space> [shape: f32[1], index: 1, kind: input, shape index: {}]
  %s2 = inlined_call_operand.vmem [shape: bf16[256,256], index: 2, kind: input, shape index: {}]
  %s3 = inlined_call_operand.vmem [shape: bf16[256,128], index: 3, kind: input, shape index: {}]
  %s4 = inlined_call_operand.vmem [shape: f32[256,128], index: 4, kind: input, shape index: {}]
  %s5 = inlined_call_operand.vmem [shape: bf16[128,128], index: 5, kind: input, shape index: {}]
  %s6 = inlined_call_operand.vmem [shape: f32[1,128], index: 6, kind: input, shape index: {}]
  %s7 = inlined_call_operand.vmem [shape: f32[256,128], index: 7, kind: output, shape index: {0}]
  %s8 = inlined_call_operand.vmem [shape: f32[4,8,128], index: 8, kind: output, shape index: {1}]
  %9 = xla_tuple %s7, %s8
  %s10 = sld [smem:[#allocation0]]
  $region118: #{gin_layer_forward.3} parent=0
    _
  %s12 = ssub.s32 1, %s10
  %s13 = scalar_select 0, %s12, %s10
  %s14 = sshll.u32 %s0, 4
  %s15 = int_to_ptr.vmem [resolvable:$true] %s14
  %17 = dma.vmem_to_smem %s15, 64, [#allocation4], [#allocation3]
  %18 = sst [smem:[#allocation5]] %s1
  %19 = dma.done [#allocation3], 64
  %20 = sfence
  $region1: #{gin_layer_forward.3} parent=0
    #allocation6 [shape = 'u8[32768]{0}', space=vmem, size = 0x8000, scoped, tag = 'input window, operand 2']
    loop: start=0, step=1, limit=10
    $region2: #{gin_layer_forward.3} parent=1 // loop_pre_header
      _
    $region3: #{gin_layer_forward.3} parent=1 // loop_header
      %s22 = sphi 0, %s26
      %p23 = scmp.ge.s32.totalorder %s22, 10
      %s29 = sphi 0, %s41
      %s30 = sphi 0, %s37
      %s31 = sphi 0, %s29
      %s32 = sphi 0, %s30
      %s33 = sphi 0, %s31
      %s34 = sphi 0, %s32
      %s42 = sphi 0, %s42
      %s44 = sphi 0, %s42
      %s45 = sphi 0, %s44
      %s59 = sphi 0, %s45
      %s67 = sphi 0, %s69
      %s70 = sphi 0, %s67
      %s71 = sphi 0, %s70
      %s87 = sphi 0, %s71
      %s93 = sphi 0, %s95
      %s96 = sphi 0, %s93
      %s97 = sphi 0, %s96
      %s113 = sphi 0, %s97
      %s119 = sphi 0, %s121
      %s122 = sphi 0, %s119
      %s123 = sphi 0, %s122
      %s139 = sphi 0, %s123
      %s143 = sphi 0, %s143
      %s145 = sphi 0, %s143
      %s146 = sphi 0, %s145
      %s160 = sphi 0, %s146
      %s164 = sphi 0, %s164
      %s166 = sphi 0, %s164
      %s167 = sphi 0, %s166
      %s181 = sphi 0, %s167
      %s187 = sphi 0, %s189
      %s190 = sphi 0, %s187
      %s191 = sphi 0, %s190
      %s207 = sphi 0, %s191
      %s213 = sphi 0, %s215
      %s216 = sphi 0, %s213
      %s217 = sphi 0, %s216
      %s233 = sphi 0, %s217
    $region4: #{gin_layer_forward.3} parent=1 // loop_header_branch
      %25 = sbr.rel (%p23) target = $region8
    $region5: #{gin_layer_forward.3} parent=1 // loop_body
      %s27 = ssub.s32 %s22, 1
      %s28 = ssub.s32 %s22, 2
      %s35 = sadd.s32 1, %s30
      %p36 = scmp.ge.s32.totalorder %s35, 2
      %s37 = scalar_select %p36, 0, %s35
      %s38 = sadd.s32 1, %s29
      %s39 = scalar_select %p36, %s38, %s29
      %p40 = scmp.ge.s32.totalorder %s39, 4
      %s41 = scalar_select %p40, 0, %s39
      %s43 = sadd.s32 %s42, 1
      %p46 = scmp.eq.s32.totalorder %s22, 7
      %p47 = scmp.ne.s32.totalorder %s42, %s44
      %p48 = scmp.eq.s32.totalorder %s22, 0
      %p49 = por %p47, %p48
      %p50 = scmp.ne.s32.totalorder %s42, %s44
      %p51 = scmp.eq.s32.totalorder %s27, 7
      %p52 = por %p50, %p51
      %p53 = scmp.ne.s32.totalorder %s44, %s45
      %p54 = scmp.eq.s32.totalorder %s27, 0
      %p55 = por %p53, %p54
      %p56 = scmp.ne.s32.totalorder %s44, %s45
      %p57 = scmp.eq.s32.totalorder %s28, 7
      %p58 = por %p56, %p57
      %p60 = scmp.ne.s32.totalorder %s45, %s59
      %p61 = scmp.eq.s32.totalorder %s28, 0
      %p62 = por %p60, %p61
      %s63 = ssub.s32 %s29, %s41
      %s64 = ssub.s32 %s30, %s37
      %s65 = sor.u32 %s63, %s64
      %p66 = scmp.eq.s32.totalorder %s65, 0
      %s68 = sadd.s32 %s67, 1
      %s69 = scalar_select %p66, %s67, %s68
      %p72 = pneg %p66
      %p73 = scmp.eq.s32.totalorder %s22, 7
      %p74 = por %p72, %p73
      %p75 = scmp.ne.s32.totalorder %s67, %s70
      %p76 = scmp.eq.s32.totalorder %s22, 0
      %p77 = por %p75, %p76
      %p78 = scmp.ne.s32.totalorder %s67, %s70
      %p79 = scmp.eq.s32.totalorder %s27, 7
      %p80 = por %p78, %p79
      %p81 = scmp.ne.s32.totalorder %s70, %s71
      %p82 = scmp.eq.s32.totalorder %s27, 0
      %p83 = por %p81, %p82
      %p84 = scmp.ne.s32.totalorder %s70, %s71
      %p85 = scmp.eq.s32.totalorder %s28, 7
      %p86 = por %p84, %p85
      %p88 = scmp.ne.s32.totalorder %s71, %s87
      %p89 = scmp.eq.s32.totalorder %s28, 0
      %p90 = por %p88, %p89
      %s91 = ssub.s32 %s30, %s37
      %p92 = scmp.eq.s32.totalorder %s91, 0
      %s94 = sadd.s32 %s93, 1
      %s95 = scalar_select %p92, %s93, %s94
      %p98 = pneg %p92
      %p99 = scmp.eq.s32.totalorder %s22, 7
      %p100 = por %p98, %p99
      %p101 = scmp.ne.s32.totalorder %s93, %s96
      %p102 = scmp.eq.s32.totalorder %s22, 0
      %p103 = por %p101, %p102
      %p104 = scmp.ne.s32.totalorder %s93, %s96
      %p105 = scmp.eq.s32.totalorder %s27, 7
      %p106 = por %p104, %p105
      %p107 = scmp.ne.s32.totalorder %s96, %s97
      %p108 = scmp.eq.s32.totalorder %s27, 0
      %p109 = por %p107, %p108
      %p110 = scmp.ne.s32.totalorder %s96, %s97
      %p111 = scmp.eq.s32.totalorder %s28, 7
      %p112 = por %p110, %p111
      %p114 = scmp.ne.s32.totalorder %s97, %s113
      %p115 = scmp.eq.s32.totalorder %s28, 0
      %p116 = por %p114, %p115
      %s117 = ssub.s32 %s29, %s41
      %p118 = scmp.eq.s32.totalorder %s117, 0
      %s120 = sadd.s32 %s119, 1
      %s121 = scalar_select %p118, %s119, %s120
      %p124 = pneg %p118
      %p125 = scmp.eq.s32.totalorder %s22, 7
      %p126 = por %p124, %p125
      %p127 = scmp.ne.s32.totalorder %s119, %s122
      %p128 = scmp.eq.s32.totalorder %s22, 0
      %p129 = por %p127, %p128
      %p130 = scmp.ne.s32.totalorder %s119, %s122
      %p131 = scmp.eq.s32.totalorder %s27, 7
      %p132 = por %p130, %p131
      %p133 = scmp.ne.s32.totalorder %s122, %s123
      %p134 = scmp.eq.s32.totalorder %s27, 0
      %p135 = por %p133, %p134
      %p136 = scmp.ne.s32.totalorder %s122, %s123
      %p137 = scmp.eq.s32.totalorder %s28, 7
      %p138 = por %p136, %p137
      %p140 = scmp.ne.s32.totalorder %s123, %s139
      %p141 = scmp.eq.s32.totalorder %s28, 0
      %p142 = por %p140, %p141
      %s144 = sadd.s32 %s143, 1
      %p147 = scmp.eq.s32.totalorder %s22, 7
      %p148 = scmp.ne.s32.totalorder %s143, %s145
      %p149 = scmp.eq.s32.totalorder %s22, 0
      %p150 = por %p148, %p149
      %p151 = scmp.ne.s32.totalorder %s143, %s145
      %p152 = scmp.eq.s32.totalorder %s27, 7
      %p153 = por %p151, %p152
      %p154 = scmp.ne.s32.totalorder %s145, %s146
      %p155 = scmp.eq.s32.totalorder %s27, 0
      %p156 = por %p154, %p155
      %p157 = scmp.ne.s32.totalorder %s145, %s146
      %p158 = scmp.eq.s32.totalorder %s28, 7
      %p159 = por %p157, %p158
      %p161 = scmp.ne.s32.totalorder %s146, %s160
      %p162 = scmp.eq.s32.totalorder %s28, 0
      %p163 = por %p161, %p162
      %s165 = sadd.s32 %s164, 1
      %p168 = scmp.eq.s32.totalorder %s22, 7
      %p169 = scmp.ne.s32.totalorder %s164, %s166
      %p170 = scmp.eq.s32.totalorder %s22, 0
      %p171 = por %p169, %p170
      %p172 = scmp.ne.s32.totalorder %s164, %s166
      %p173 = scmp.eq.s32.totalorder %s27, 7
      %p174 = por %p172, %p173
      %p175 = scmp.ne.s32.totalorder %s166, %s167
      %p176 = scmp.eq.s32.totalorder %s27, 0
      %p177 = por %p175, %p176
      %p178 = scmp.ne.s32.totalorder %s166, %s167
      %p179 = scmp.eq.s32.totalorder %s28, 7
      %p180 = por %p178, %p179
      %p182 = scmp.ne.s32.totalorder %s167, %s181
      %p183 = scmp.eq.s32.totalorder %s28, 0
      %p184 = por %p182, %p183
      %s185 = ssub.s32 %s29, %s41
      %p186 = scmp.eq.s32.totalorder %s185, 0
      %s188 = sadd.s32 %s187, 1
      %s189 = scalar_select %p186, %s187, %s188
      %p192 = pneg %p186
      %p193 = scmp.eq.s32.totalorder %s22, 7
      %p194 = por %p192, %p193
      %p195 = scmp.ne.s32.totalorder %s187, %s190
      %p196 = scmp.eq.s32.totalorder %s22, 0
      %p197 = por %p195, %p196
      %p198 = scmp.ne.s32.totalorder %s187, %s190
      %p199 = scmp.eq.s32.totalorder %s27, 7
      %p200 = por %p198, %p199
      %p201 = scmp.ne.s32.totalorder %s190, %s191
      %p202 = scmp.eq.s32.totalorder %s27, 0
      %p203 = por %p201, %p202
      %p204 = scmp.ne.s32.totalorder %s190, %s191
      %p205 = scmp.eq.s32.totalorder %s28, 7
      %p206 = por %p204, %p205
      %p208 = scmp.ne.s32.totalorder %s191, %s207
      %p209 = scmp.eq.s32.totalorder %s28, 0
      %p210 = por %p208, %p209
      %s211 = ssub.s32 %s29, %s41
      %p212 = scmp.eq.s32.totalorder %s211, 0
      %s214 = sadd.s32 %s213, 1
      %s215 = scalar_select %p212, %s213, %s214
      %p218 = pneg %p212
      %p219 = scmp.eq.s32.totalorder %s22, 7
      %p220 = por %p218, %p219
      %p221 = scmp.ne.s32.totalorder %s213, %s216
      %p222 = scmp.eq.s32.totalorder %s22, 0
      %p223 = por %p221, %p222
      %p224 = scmp.ne.s32.totalorder %s213, %s216
      %p225 = scmp.eq.s32.totalorder %s27, 7
      %p226 = por %p224, %p225
      %p227 = scmp.ne.s32.totalorder %s216, %s217
      %p228 = scmp.eq.s32.totalorder %s27, 0
      %p229 = por %p227, %p228
      %p230 = scmp.ne.s32.totalorder %s216, %s217
      %p231 = scmp.eq.s32.totalorder %s28, 7
      %p232 = por %p230, %p231
      %p234 = scmp.ne.s32.totalorder %s217, %s233
      %p235 = scmp.eq.s32.totalorder %s28, 0
      %p236 = por %p234, %p235
      %p237 = scmp.le.s32.totalorder 1, %s22
      %p238 = scmp.lt.s32.totalorder %s22, 9
      %p239 = pnand %p237, %p238
      %p240 = pneg %p239
      // Predicated region
      $region9: #{gin_layer_forward.3} parent=5 // pred_check
        _
      $region10: #{gin_layer_forward.3} parent=5 // pred_check_branch
        %242 = sbr.rel (%p239) target = $region12
      $region11: #{gin_layer_forward.3} parent=5 // pred_region
        %s243 = ssub.s32 %s22, 1
        // Predicated region
        $region13: #{gin_layer_forward.3} parent=11 // pred_check
          %p244 = pneg %p55
        $region14: #{gin_layer_forward.3} parent=11 // pred_check_branch
          %246 = sbr.rel (%p244) target = $region16
        $region15: #{gin_layer_forward.3} parent=11 // pred_region
          _
        $region16: #{gin_layer_forward.3} parent=11 // pred_fallthru
          _
        // Predicated region
        $region17: #{gin_layer_forward.3} parent=11 // pred_check
          %p247 = pneg %p156
        $region18: #{gin_layer_forward.3} parent=11 // pred_check_branch
          %249 = sbr.rel (%p247) target = $region20
        $region19: #{gin_layer_forward.3} parent=11 // pred_region
          _
        $region20: #{gin_layer_forward.3} parent=11 // pred_fallthru
          _
        // Predicated region
        $region21: #{gin_layer_forward.3} parent=11 // pred_check
          %p250 = pneg %p177
        $region22: #{gin_layer_forward.3} parent=11 // pred_check_branch
          %252 = sbr.rel (%p250) target = $region24
        $region23: #{gin_layer_forward.3} parent=11 // pred_region
          _
        $region24: #{gin_layer_forward.3} parent=11 // pred_fallthru
          _
      $region12: #{gin_layer_forward.3} parent=5 // pred_fallthru
        _
      %p253 = scmp.lt.s32.totalorder %s22, 8
      // Predicated region
      $region25: #{gin_layer_forward.3} parent=5 // pred_check
        %p254 = pneg %p253
      $region26: #{gin_layer_forward.3} parent=5 // pred_check_branch
        %256 = sbr.rel (%p254) target = $region28
      $region27: #{gin_layer_forward.3} parent=5 // pred_region
        // Predicated region
        $region29: #{gin_layer_forward.3} parent=27 // pred_check
          %p257 = pneg %p77
        $region30: #{gin_layer_forward.3} parent=27 // pred_check_branch
          %259 = sbr.rel (%p257) target = $region32
        $region31: #{gin_layer_forward.3} parent=27 // pred_region
          %s260 = sand.u32 %s67, 1
          %s261 = sand.u32 %s67, 1
          %s262 = smul.addr %s261, 32
          %s263 = scalar_lea.vmem [#allocation6], %s262
          %s264 = smul.u32 8, %s29
          %s265 = smul.addr %s264, 2
          %s266 = sadd.s32 %s30, %s265
          %s267 = smul.addr %s266, 4
          %s268 = scalar_lea.vmem %s2, %s267
          // Predicated region
          $region33: #{gin_layer_forward.3} parent=31 // pred_check
            _
          $region34: #{gin_layer_forward.3} parent=31 // pred_check_branch
            %270 = sbr.rel (0) target = $region36
          $region35: #{gin_layer_forward.3} parent=31 // pred_region
            // Predicated region
            $region37: #{gin_layer_forward.3} parent=35 // pred_check
              _
            $region38: #{gin_layer_forward.3} parent=35 // pred_check_branch
              %272 = sbr.rel target = $region40
            $region39: #{gin_layer_forward.3} parent=35 // pred_region
              // Predicated region
              $region52: #{gin_layer_forward.3} parent=39 // pred_check
                _
              $region53: #{gin_layer_forward.3} parent=39 // pred_check_branch
                %301 = sbr.rel (0) target = $region55
              $region54: #{gin_layer_forward.3} parent=39 // pred_region
                loop: start=0, step=1, limit=1
                $region56: #{gin_layer_forward.3} parent=54 // loop_pre_header
                  _
                $region57: #{gin_layer_forward.3} parent=54 // loop_header
                  %s303 = sphi 0, %s307
                  %p304 = scmp.ge.s32.totalorder %s303, 1
                  %s308 = sphi %s268, %s268
                  %s309 = sphi %s263, %s263
                $region58: #{gin_layer_forward.3} parent=54 // loop_header_branch
                  %306 = sbr.rel (%p304) target = $region62
                $region59: #{gin_layer_forward.3} parent=54 // loop_body
                  _
                $region60: #{gin_layer_forward.3} parent=54 // loop_footer
                  %s307 = sadd.s32 1, %s303
                $region61: #{gin_layer_forward.3} parent=54 // loop_footer_branch
                  %302 = sbr.rel target = $region57
                $region62: #{gin_layer_forward.3} parent=54 // loop_exit
                  _
                loop: start=0, step=1, limit=1
                $region63: #{gin_layer_forward.3} parent=54 // loop_pre_header
                  _
                $region64: #{gin_layer_forward.3} parent=54 // loop_header
                  %s312 = sphi 0, %s316
                  %p313 = scmp.ge.s32.totalorder %s312, 1
                  %s317 = sphi %s268, %s268
                  %s318 = sphi %s263, %s263
                $region65: #{gin_layer_forward.3} parent=54 // loop_header_branch
                  %315 = sbr.rel (%p313) target = $region69
                $region66: #{gin_layer_forward.3} parent=54 // loop_body
                  %v319 = vld [vmem:[%s317] sm:$0xf]
                  %320 = vst [vmem:[%s318] sm:$0xf] %v319
                  %v321 = vld [vmem:[%s317 + $0x8] sm:$0xf]
                  %322 = vst [vmem:[%s318 + $0x4] sm:$0xf] %v321
                  %v323 = vld [vmem:[%s317 + $0x10] sm:$0xf]
                  %324 = vst [vmem:[%s318 + $0x8] sm:$0xf] %v323
                  %v325 = vld [vmem:[%s317 + $0x18] sm:$0xf]
                  %326 = vst [vmem:[%s318 + $0xc] sm:$0xf] %v325
                  %v327 = vld [vmem:[%s317 + $0x20] sm:$0xf]
                  %328 = vst [vmem:[%s318 + $0x10] sm:$0xf] %v327
                  %v329 = vld [vmem:[%s317 + $0x28] sm:$0xf]
                  %330 = vst [vmem:[%s318 + $0x14] sm:$0xf] %v329
                  %v331 = vld [vmem:[%s317 + $0x30] sm:$0xf]
                  %332 = vst [vmem:[%s318 + $0x18] sm:$0xf] %v331
                  %v333 = vld [vmem:[%s317 + $0x38] sm:$0xf]
                  %334 = vst [vmem:[%s318 + $0x1c] sm:$0xf] %v333
                $region67: #{gin_layer_forward.3} parent=54 // loop_footer
                  %s316 = sadd.s32 1, %s312
                $region68: #{gin_layer_forward.3} parent=54 // loop_footer_branch
                  %311 = sbr.rel target = $region64
                $region69: #{gin_layer_forward.3} parent=54 // loop_exit
                  _
              $region55: #{gin_layer_forward.3} parent=39 // pred_fallthru
                _
            $region40: #{gin_layer_forward.3} parent=35 // pred_fallthru
              _
            // Predicated region
            $region41: #{gin_layer_forward.3} parent=35 // pred_check
              _
            $region42: #{gin_layer_forward.3} parent=35 // pred_check_branch
              %274 = sbr.rel (0) target = $region44
            $region43: #{gin_layer_forward.3} parent=35 // pred_region
              loop: start=0, step=1, limit=1
              $region45: #{gin_layer_forward.3} parent=43 // loop_pre_header
                _
              $region46: #{gin_layer_forward.3} parent=43 // loop_header
                %s277 = sphi 0, %s281
                %p278 = scmp.ge.s32.totalorder %s277, 1
                %s282 = sphi %s268, %s268
                %s283 = sphi %s263, %s263
              $region47: #{gin_layer_forward.3} parent=43 // loop_header_branch
                %280 = sbr.rel (%p278) target = $region51
              $region48: #{gin_layer_forward.3} parent=43 // loop_body
                %v284 = vld [vmem:[%s282] sm:$0xf]
                %285 = vst [vmem:[%s283] sm:$0xf] %v284
                %v286 = vld [vmem:[%s282 + $0x8] sm:$0xf]
                %287 = vst [vmem:[%s283 + $0x4] sm:$0xf] %v286
                %v288 = vld [vmem:[%s282 + $0x10] sm:$0xf]
                %289 = vst [vmem:[%s283 + $0x8] sm:$0xf] %v288
                %v290 = vld [vmem:[%s282 + $0x18] sm:$0xf]
                %291 = vst [vmem:[%s283 + $0xc] sm:$0xf] %v290
                %v292 = vld [vmem:[%s282 + $0x20] sm:$0xf]
                %293 = vst [vmem:[%s283 + $0x10] sm:$0xf] %v292
                %v294 = vld [vmem:[%s282 + $0x28] sm:$0xf]
                %295 = vst [vmem:[%s283 + $0x14] sm:$0xf] %v294
                %v296 = vld [vmem:[%s282 + $0x30] sm:$0xf]
                %297 = vst [vmem:[%s283 + $0x18] sm:$0xf] %v296
                %v298 = vld [vmem:[%s282 + $0x38] sm:$0xf]
                %299 = vst [vmem:[%s283 + $0x1c] sm:$0xf] %v298
              $region49: #{gin_layer_forward.3} parent=43 // loop_footer
                %s281 = sadd.s32 1, %s277
              $region50: #{gin_layer_forward.3} parent=43 // loop_footer_branch
                %276 = sbr.rel target = $region46
              $region51: #{gin_layer_forward.3} parent=43 // loop_exit
                _
            $region44: #{gin_layer_forward.3} parent=35 // pred_fallthru
              _
          $region36: #{gin_layer_forward.3} parent=31 // pred_fallthru
            _
          %335 = vnop
        $region32: #{gin_layer_forward.3} parent=27 // pred_fallthru
          _
        // Predicated region
        $region70: #{gin_layer_forward.3} parent=27 // pred_check
          %p336 = pneg %p103
        $region71: #{gin_layer_forward.3} parent=27 // pred_check_branch
          %338 = sbr.rel (%p336) target = $region73
        $region72: #{gin_layer_forward.3} parent=27 // pred_region
          %s339 = smul.u32 16, %s30
          %p340 = scmp.lt.s32.totalorder %s339, 31
          %s341 = scalar_select %p340, %s339, 31
          %s342 = smul.addr %s341, 4
          %s343 = scalar_lea.vmem %s3, %s342
          %s344 = smul.u32 16, %s30
        $region73: #{gin_layer_forward.3} parent=27 // pred_fallthru
          _
        // Predicated region
        $region74: #{gin_layer_forward.3} parent=27 // pred_check
          %p345 = pneg %p129
        $region75: #{gin_layer_forward.3} parent=27 // pred_check_branch
          %347 = sbr.rel (%p345) target = $region77
        $region76: #{gin_layer_forward.3} parent=27 // pred_region
          %s348 = smul.u32 8, %s29
          %p349 = scmp.lt.s32.totalorder %s348, 31
          %s350 = scalar_select %p349, %s348, 31
          %s351 = smul.addr %s350, 8
          %s352 = scalar_lea.vmem %s4, %s351
          %s353 = smul.u32 8, %s29
        $region77: #{gin_layer_forward.3} parent=27 // pred_fallthru
          _
      $region28: #{gin_layer_forward.3} parent=5 // pred_fallthru
        _
      %p354 = scmp.le.s32.totalorder 1, %s22
      %p355 = scmp.lt.s32.totalorder %s22, 9
      %p356 = pnand %p354, %p355
      %p357 = pneg %p356
      // Predicated region
      $region78: #{gin_layer_forward.3} parent=5 // pred_check
        _
      $region79: #{gin_layer_forward.3} parent=5 // pred_check_branch
        %359 = sbr.rel (%p356) target = $region81
      $region80: #{gin_layer_forward.3} parent=5 // pred_region
        %s360 = ssub.s32 %s22, 1
        %s361 = sand.u32 %s70, 1
        %s362 = sand.u32 %s70, 1
        %s363 = smul.addr %s362, 32
        %s364 = scalar_lea.vmem [#allocation6], %s363
        // Predicated region
        $region82: #{gin_layer_forward.3} parent=80 // pred_check
          %p365 = pneg %p83
        $region83: #{gin_layer_forward.3} parent=80 // pred_check_branch
          %367 = sbr.rel (%p365) target = $region85
        $region84: #{gin_layer_forward.3} parent=80 // pred_region
          _
        $region85: #{gin_layer_forward.3} parent=80 // pred_fallthru
          _
        %p368 = pneg %p55
        %p369 = pneg %p52
        %s370 = sand.u32 %s70, 1
        %s371 = sand.u32 %s70, 1
        %s372 = smul.addr %s371, 32
        %s373 = scalar_lea.vmem [#allocation6], %s372
        %p374 = pneg %p83
        %p375 = pneg %p80
        %s376 = smul.u32 16, %s32
        %p377 = scmp.lt.s32.totalorder %s376, 31
        %s378 = scalar_select %p377, %s376, 31
        %s379 = smul.addr %s378, 4
        %s380 = scalar_lea.vmem %s3, %s379
        %p381 = pneg %p109
        %p382 = pneg %p106
        %s383 = smul.u32 8, %s31
        %p384 = scmp.lt.s32.totalorder %s383, 31
        %s385 = scalar_select %p384, %s383, 31
        %s386 = smul.addr %s385, 8
        %s387 = scalar_lea.vmem %s4, %s386
        %p388 = pneg %p135
        %p389 = pneg %p132
        %p390 = pneg %p156
        %p391 = pneg %p153
        %p392 = pneg %p177
        %p393 = pneg %p174
        %p394 = pneg %p203
        %p395 = pneg %p200
        %s396 = smul.u32 8, %s31
        %p397 = scmp.lt.s32.totalorder %s396, 31
        %s398 = scalar_select %p397, %s396, 31
        %s399 = smul.addr %s398, 8
        %s400 = scalar_lea.vmem %s7, %s399
        %p401 = pneg %p229
        %p402 = pneg %p226
        %p403 = scmp.lt.s32.totalorder %s31, 3
        %s404 = scalar_select %p403, %s31, 3
        %s405 = smul.addr %s404, 8
        %s406 = scalar_lea.vmem %s8, %s405
        %s407 = smul.u32 8, %s31
        %s408 = smul.u32 16, %s32
        %p409 = scmp.lt.s32.totalorder %s408, 31
        %s410 = scalar_select %p409, %s408, 31
        %s411 = smul.addr %s410, 4
        %s412 = scalar_lea.vmem %s3, %s411
        %s413 = smul.u32 16, %s32
        %s414 = smul.u32 8, %s31
        %p415 = scmp.lt.s32.totalorder %s414, 31
        %s416 = scalar_select %p415, %s414, 31
        %s417 = smul.addr %s416, 8
        %s418 = scalar_lea.vmem %s4, %s417
        %s419 = smul.u32 8, %s31
        %s420 = smul.u32 8, %s31
        %p421 = scmp.lt.s32.totalorder %s420, 31
        %s422 = scalar_select %p421, %s420, 31
        %s423 = smul.addr %s422, 8
        %s424 = scalar_lea.vmem %s7, %s423
        %s425 = smul.u32 8, %s31
        %p426 = scmp.lt.s32.totalorder %s31, 3
        %s427 = scalar_select %p426, %s31, 3
        %s428 = smul.addr %s427, 8
        %s429 = scalar_lea.vmem %s8, %s428
        %p431 = scmp.eq.s32.totalorder %s32, 0
        // Predicated region
        $region86: #{gin_layer_forward.3} parent=80 // pred_check
          %p432 = pneg %p431
        $region87: #{gin_layer_forward.3} parent=80 // pred_check_branch
          %434 = sbr.rel (%p432) target = $region89
        $region88: #{gin_layer_forward.3} parent=80 // pred_region
          %435 = vst [vmem:[#allocation2] sm:$0xff] 0.0
          %436 = vst [vmem:[#allocation2 + $0x8] sm:$0xff] 0.0
          %437 = vst [vmem:[#allocation2 + $0x10] sm:$0xff] 0.0
          %438 = vst [vmem:[#allocation2 + $0x18] sm:$0xff] 0.0
          %439 = vst [vmem:[#allocation2 + $0x20] sm:$0xff] 0.0
          %440 = vst [vmem:[#allocation2 + $0x28] sm:$0xff] 0.0
          %441 = vst [vmem:[#allocation2 + $0x30] sm:$0xff] 0.0
          %442 = vst [vmem:[#allocation2 + $0x38] sm:$0xff] 0.0
        $region89: #{gin_layer_forward.3} parent=80 // pred_fallthru
          _
        %s443 = sshra.s32 %s32, 7
        %s444 = sand.u32 %s32, 127
        %s445 = sadd.s32 %s443, %s31
        %s446 = smul.u32 %s445, 128
        %s447 = sshra.s32 %s32, 7
        %s448 = sand.u32 %s32, 127
        %s449 = sadd.s32 %s446, %s448
        %s450 = sld [smem:[#allocation4 + %s449]]
        %p451 = scmp.ne.s32.totalorder %s450, 0
        // Predicated region
        $region90: #{gin_layer_forward.3} parent=80 // pred_check
          %p452 = pneg %p451
        $region91: #{gin_layer_forward.3} parent=80 // pred_check_branch
          %454 = sbr.rel (%p452) target = $region93
        $region92: #{gin_layer_forward.3} parent=80 // pred_region
          %v455 = vld [vmem:[#allocation2] sm:$0xff]
          %v456 = vld [vmem:[#allocation2 + $0x8] sm:$0xff]
          %v457 = vld [vmem:[#allocation2 + $0x10] sm:$0xff]
          %v458 = vld [vmem:[#allocation2 + $0x18] sm:$0xff]
          %v459 = vld [vmem:[#allocation2 + $0x20] sm:$0xff]
          %v460 = vld [vmem:[#allocation2 + $0x28] sm:$0xff]
          %v461 = vld [vmem:[#allocation2 + $0x30] sm:$0xff]
          %v462 = vld [vmem:[#allocation2 + $0x38] sm:$0xff]
          %v463 = vld [vmem:[%s364] sm:$0xf]
          %v464 = vld [vmem:[%s364 + $0x4] sm:$0xf]
          %v465 = vld [vmem:[%s364 + $0x8] sm:$0xf]
          %v466 = vld [vmem:[%s364 + $0xc] sm:$0xf]
          %v467 = vld [vmem:[%s364 + $0x10] sm:$0xf]
          %v468 = vld [vmem:[%s364 + $0x14] sm:$0xf]
          %v469 = vld [vmem:[%s364 + $0x18] sm:$0xf]
          %v470 = vld [vmem:[%s364 + $0x1c] sm:$0xf]
          %v471 = vld [vmem:[%s412] sm:$0xf]
          %v472 = vld [vmem:[%s412 + $0x4] sm:$0xf]
          %v473 = vld [vmem:[%s412 + $0x8] sm:$0xf]
          %v474 = vld [vmem:[%s412 + $0xc] sm:$0xf]
          %v475 = vld [vmem:[%s412 + $0x10] sm:$0xf]
          %v476 = vld [vmem:[%s412 + $0x14] sm:$0xf]
          %v477 = vld [vmem:[%s412 + $0x18] sm:$0xf]
          %v478 = vld [vmem:[%s412 + $0x1c] sm:$0xf]
          %v479 = vld [vmem:[%s412 + $0x20] sm:$0xf]
          %v480 = vld [vmem:[%s412 + $0x24] sm:$0xf]
          %v481 = vld [vmem:[%s412 + $0x28] sm:$0xf]
          %v482 = vld [vmem:[%s412 + $0x2c] sm:$0xf]
          %v483 = vld [vmem:[%s412 + $0x30] sm:$0xf]
          %v484 = vld [vmem:[%s412 + $0x34] sm:$0xf]
          %v485 = vld [vmem:[%s412 + $0x38] sm:$0xf]
          %v486 = vld [vmem:[%s412 + $0x3c] sm:$0xf]
          %v495 = vunpack.c.l.b16 %v463
          %v496 = vunpack.c.l.b16 %v464
          %v497 = vunpack.c.l.b16 %v465
          %v498 = vunpack.c.l.b16 %v466
          %v499 = vunpack.c.l.b16 %v467
          %v500 = vunpack.c.l.b16 %v468
          %v501 = vunpack.c.l.b16 %v469
          %v502 = vunpack.c.l.b16 %v470
          %v503 = vpack.c.b16 %v496, %v495
          %v504 = vpack.c.b16 %v498, %v497
          %v505 = vpack.c.b16 %v500, %v499
          %v506 = vpack.c.b16 %v502, %v501
          %v527 = vunpack.c.l.b16 %v471
          %v528 = vunpack.c.l.b16 %v472
          %v529 = vunpack.c.l.b16 %v473
          %v530 = vunpack.c.l.b16 %v474
          %v531 = vunpack.c.l.b16 %v475
          %v532 = vunpack.c.l.b16 %v476
          %v533 = vunpack.c.l.b16 %v477
          %v534 = vunpack.c.l.b16 %v478
          %v535 = vunpack.c.l.b16 %v479
          %v536 = vunpack.c.l.b16 %v480
          %v537 = vunpack.c.l.b16 %v481
          %v538 = vunpack.c.l.b16 %v482
          %v539 = vunpack.c.l.b16 %v483
          %v540 = vunpack.c.l.b16 %v484
          %v541 = vunpack.c.l.b16 %v485
          %v542 = vunpack.c.l.b16 %v486
          %v543 = vpack.c.b16 %v528, %v527
          %v544 = vpack.c.b16 %v530, %v529
          %v545 = vpack.c.b16 %v532, %v531
          %v546 = vpack.c.b16 %v534, %v533
          %v547 = vpack.c.b16 %v536, %v535
          %v548 = vpack.c.b16 %v538, %v537
          %v549 = vpack.c.b16 %v540, %v539
          %v550 = vpack.c.b16 %v542, %v541
          %559 = vmatprep.subr.bf16.mxu0 0
          %560 = vmatpush1.bf16.msra.mxu0 %v543
          %561 = vmatprep.subr.bf16.mxu0 0
          %562 = vmatpush1.bf16.msra.mxu0 %v544
          %563 = vmatprep.subr.bf16.mxu0 0
          %564 = vmatpush1.bf16.msra.mxu0 %v545
          %565 = vmatprep.subr.bf16.mxu0 0
          %566 = vmatpush1.bf16.msra.mxu0 %v546
          %567 = vmatprep.subr.bf16.mxu0 0
          %568 = vmatpush1.bf16.msra.mxu0 %v547
          %569 = vmatprep.subr.bf16.mxu0 0
          %570 = vmatpush1.bf16.msra.mxu0 %v548
          %571 = vmatprep.subr.bf16.mxu0 0
          %572 = vmatpush1.bf16.msra.mxu0 %v549
          %573 = vmatprep.subr.bf16.mxu0 0
          %574 = vmatpush1.bf16.msra.mxu0 %v550
          %575 = vmatprep.subr.bf16.mxu0 0
          %576 = vmatpush1.bf16.msra.mxu0 0
          %577 = vmatprep.subr.bf16.mxu0 0
          %578 = vmatpush1.bf16.msra.mxu0 0
          %579 = vmatprep.subr.bf16.mxu0 0
          %580 = vmatpush1.bf16.msra.mxu0 0
          %581 = vmatprep.subr.bf16.mxu0 0
          %582 = vmatpush1.bf16.msra.mxu0 0
          %583 = vmatprep.subr.bf16.mxu0 0
          %584 = vmatpush1.bf16.msra.mxu0 0
          %585 = vmatprep.subr.bf16.mxu0 0
          %586 = vmatpush1.bf16.msra.mxu0 0
          %587 = vmatprep.subr.bf16.mxu0 0
          %588 = vmatpush1.bf16.msra.mxu0 0
          %589 = vmatprep.subr.bf16.mxu0 0
          %590 = vmatpush1.bf16.msra.mxu0 0
          %591 = vmatprep.mubr.bf16.mxu0 0
          %592 = vmatmul.mubr.bf16.gmra.mrb[0].mxu0 %v503
          %v593 = vpop.f32.mrb[0].mxu0
          %v594 = vadd.f32 0.0, %v593
          %v595 = vpop.f32.mrb[0].mxu0
          %v596 = vpop.f32.mrb[0].mxu0
          %v597 = vadd.f32 0.0, %v596
          %v598 = vpop.f32.mrb[0].mxu0
          %599 = vmatprep.mubr.bf16.mxu0 0
          %600 = vmatmul.mubr.bf16.gmra.mrb[0].mxu0 %v504
          %v601 = vpop.f32.mrb[0].mxu0
          %v602 = vadd.f32 0.0, %v601
          %v603 = vpop.f32.mrb[0].mxu0
          %v604 = vpop.f32.mrb[0].mxu0
          %v605 = vadd.f32 0.0, %v604
          %v606 = vpop.f32.mrb[0].mxu0
          %607 = vmatprep.mubr.bf16.mxu0 0
          %608 = vmatmul.mubr.bf16.gmra.mrb[0].mxu0 %v505
          %v609 = vpop.f32.mrb[0].mxu0
          %v610 = vadd.f32 0.0, %v609
          %v611 = vpop.f32.mrb[0].mxu0
          %v612 = vpop.f32.mrb[0].mxu0
          %v613 = vadd.f32 0.0, %v612
          %v614 = vpop.f32.mrb[0].mxu0
          %615 = vmatprep.mubr.bf16.mxu0 0
          %616 = vmatmul.mubr.bf16.gmra.mrb[0].mxu0 %v506
          %v617 = vpop.f32.mrb[0].mxu0
          %v618 = vadd.f32 0.0, %v617
          %v619 = vpop.f32.mrb[0].mxu0
          %v620 = vpop.f32.mrb[0].mxu0
          %v621 = vadd.f32 0.0, %v620
          %v622 = vpop.f32.mrb[0].mxu0
          %623 = vdwg.mxu0
          %v624 = vadd.f32 %v455, %v594
          %v625 = vadd.f32 %v456, %v597
          %v626 = vadd.f32 %v457, %v602
          %v627 = vadd.f32 %v458, %v605
          %v628 = vadd.f32 %v459, %v610
          %v629 = vadd.f32 %v460, %v613
          %v630 = vadd.f32 %v461, %v618
          %v631 = vadd.f32 %v462, %v621
          %632 = vst [vmem:[#allocation2] sm:$0xff] %v624
          %633 = vst [vmem:[#allocation2 + $0x8] sm:$0xff] %v625
          %634 = vst [vmem:[#allocation2 + $0x10] sm:$0xff] %v626
          %635 = vst [vmem:[#allocation2 + $0x18] sm:$0xff] %v627
          %636 = vst [vmem:[#allocation2 + $0x20] sm:$0xff] %v628
          %637 = vst [vmem:[#allocation2 + $0x28] sm:$0xff] %v629
          %638 = vst [vmem:[#allocation2 + $0x30] sm:$0xff] %v630
          %639 = vst [vmem:[#allocation2 + $0x38] sm:$0xff] %v631
        $region93: #{gin_layer_forward.3} parent=80 // pred_fallthru
          _
        %p640 = scmp.eq.s32.totalorder %s32, 1
        // Predicated region
        $region94: #{gin_layer_forward.3} parent=80 // pred_check
          %p641 = pneg %p640
        $region95: #{gin_layer_forward.3} parent=80 // pred_check_branch
          %643 = sbr.rel (%p641) target = $region97
        $region96: #{gin_layer_forward.3} parent=80 // pred_region
          %s644 = sld [smem:[#allocation5]]
          %s645 = sadd.f32 %s644, 1.0
          %v646 = vld [vmem:[%s418] sm:$0xff]
          %v647 = vld [vmem:[%s418 + $0x8] sm:$0xff]
          %v648 = vld [vmem:[%s418 + $0x10] sm:$0xff]
          %v649 = vld [vmem:[%s418 + $0x18] sm:$0xff]
          %v650 = vld [vmem:[%s418 + $0x20] sm:$0xff]
          %v651 = vld [vmem:[%s418 + $0x28] sm:$0xff]
          %v652 = vld [vmem:[%s418 + $0x30] sm:$0xff]
          %v653 = vld [vmem:[%s418 + $0x38] sm:$0xff]
          %v654 = vstv %s645
          %v655 = vmul.f32 %v654, %v646
          %v656 = vmul.f32 %v654, %v647
          %v657 = vmul.f32 %v654, %v648
          %v658 = vmul.f32 %v654, %v649
          %v659 = vmul.f32 %v654, %v650
          %v660 = vmul.f32 %v654, %v651
          %v661 = vmul.f32 %v654, %v652
          %v662 = vmul.f32 %v654, %v653
          %v663 = vld [vmem:[#allocation2] sm:$0xff]
          %v664 = vld [vmem:[#allocation2 + $0x8] sm:$0xff]
          %v665 = vld [vmem:[#allocation2 + $0x10] sm:$0xff]
          %v666 = vld [vmem:[#allocation2 + $0x18] sm:$0xff]
          %v667 = vld [vmem:[#allocation2 + $0x20] sm:$0xff]
          %v668 = vld [vmem:[#allocation2 + $0x28] sm:$0xff]
          %v669 = vld [vmem:[#allocation2 + $0x30] sm:$0xff]
          %v670 = vld [vmem:[#allocation2 + $0x38] sm:$0xff]
          %v671 = vadd.f32 %v655, %v663
          %v672 = vadd.f32 %v656, %v664
          %v673 = vadd.f32 %v657, %v665
          %v674 = vadd.f32 %v658, %v666
          %v675 = vadd.f32 %v659, %v667
          %v676 = vadd.f32 %v660, %v668
          %v677 = vadd.f32 %v661, %v669
          %v678 = vadd.f32 %v662, %v670
          %v679 = vpack.c.bf16 %v672, %v671
          %v680 = vpack.c.bf16 %v674, %v673
          %v681 = vpack.c.bf16 %v676, %v675
          %v682 = vpack.c.bf16 %v678, %v677
          %v683 = vld [vmem:[%s5] sm:$0xf]
          %v684 = vld [vmem:[%s5 + $0x4] sm:$0xf]
          %v685 = vld [vmem:[%s5 + $0x8] sm:$0xf]
          %v686 = vld [vmem:[%s5 + $0xc] sm:$0xf]
          %v687 = vld [vmem:[%s5 + $0x10] sm:$0xf]
          %v688 = vld [vmem:[%s5 + $0x14] sm:$0xf]
          %v689 = vld [vmem:[%s5 + $0x18] sm:$0xf]
          %v690 = vld [vmem:[%s5 + $0x1c] sm:$0xf]
          %v691 = vld [vmem:[%s5 + $0x20] sm:$0xf]
          %v692 = vld [vmem:[%s5 + $0x24] sm:$0xf]
          %v693 = vld [vmem:[%s5 + $0x28] sm:$0xf]
          %v694 = vld [vmem:[%s5 + $0x2c] sm:$0xf]
          %v695 = vld [vmem:[%s5 + $0x30] sm:$0xf]
          %v696 = vld [vmem:[%s5 + $0x34] sm:$0xf]
          %v697 = vld [vmem:[%s5 + $0x38] sm:$0xf]
          %v698 = vld [vmem:[%s5 + $0x3c] sm:$0xf]
          %v699 = vld [vmem:[%s6] sm:$0x1]
          %v701 = vlaneseq
          %v702 = vshrl.u32 %v701, 7
          %v703 = vsub.s32 0, %v702
          %v704 = vrot.slane %v699, %v703
          %v722 = vunpack.c.l.b16 %v683
          %v723 = vunpack.c.l.b16 %v684
          %v724 = vunpack.c.l.b16 %v685
          %v725 = vunpack.c.l.b16 %v686
          %v726 = vunpack.c.l.b16 %v687
          %v727 = vunpack.c.l.b16 %v688
          %v728 = vunpack.c.l.b16 %v689
          %v729 = vunpack.c.l.b16 %v690
          %v730 = vunpack.c.l.b16 %v691
          %v731 = vunpack.c.l.b16 %v692
          %v732 = vunpack.c.l.b16 %v693
          %v733 = vunpack.c.l.b16 %v694
          %v734 = vunpack.c.l.b16 %v695
          %v735 = vunpack.c.l.b16 %v696
          %v736 = vunpack.c.l.b16 %v697
          %v737 = vunpack.c.l.b16 %v698
          %v738 = vpack.c.b16 %v723, %v722
          %v739 = vpack.c.b16 %v725, %v724
          %v740 = vpack.c.b16 %v727, %v726
          %v741 = vpack.c.b16 %v729, %v728
          %v742 = vpack.c.b16 %v731, %v730
          %v743 = vpack.c.b16 %v733, %v732
          %v744 = vpack.c.b16 %v735, %v734
          %v745 = vpack.c.b16 %v737, %v736
          %754 = vmatprep.subr.bf16.mxu0 0
          %755 = vmatpush1.bf16.xpose.msra.mxu0 %v738
          %756 = vmatprep.subr.bf16.mxu0 0
          %757 = vmatpush1.bf16.xpose.msra.mxu0 %v739
          %758 = vmatprep.subr.bf16.mxu0 0
          %759 = vmatpush1.bf16.xpose.msra.mxu0 %v740
          %760 = vmatprep.subr.bf16.mxu0 0
          %761 = vmatpush1.bf16.xpose.msra.mxu0 %v741
          %762 = vmatprep.subr.bf16.mxu0 0
          %763 = vmatpush1.bf16.xpose.msra.mxu0 %v742
          %764 = vmatprep.subr.bf16.mxu0 0
          %765 = vmatpush1.bf16.xpose.msra.mxu0 %v743
          %766 = vmatprep.subr.bf16.mxu0 0
          %767 = vmatpush1.bf16.xpose.msra.mxu0 %v744
          %768 = vmatprep.subr.bf16.mxu0 0
          %769 = vmatpush1.bf16.xpose.msra.mxu0 %v745
          %770 = vmatprep.subr.bf16.mxu0 0
          %771 = vmatpush1.bf16.xpose.msra.mxu0 0
          %772 = vmatprep.subr.bf16.mxu0 0
          %773 = vmatpush1.bf16.xpose.msra.mxu0 0
          %774 = vmatprep.subr.bf16.mxu0 0
          %775 = vmatpush1.bf16.xpose.msra.mxu0 0
          %776 = vmatprep.subr.bf16.mxu0 0
          %777 = vmatpush1.bf16.xpose.msra.mxu0 0
          %778 = vmatprep.subr.bf16.mxu0 0
          %779 = vmatpush1.bf16.xpose.msra.mxu0 0
          %780 = vmatprep.subr.bf16.mxu0 0
          %781 = vmatpush1.bf16.xpose.msra.mxu0 0
          %782 = vmatprep.subr.bf16.mxu0 0
          %783 = vmatpush1.bf16.xpose.msra.mxu0 0
          %784 = vmatprep.subr.bf16.mxu0 0
          %785 = vmatpush1.bf16.xpose.msra.mxu0 0
          %786 = vmatprep.mubr.bf16.mxu0 0
          %787 = vmatmul.mubr.bf16.gmra.mrb[0].mxu0 %v679
          %v788 = vpop.f32.mrb[0].mxu0
          %v789 = vadd.f32 %v704, %v788
          %v790 = vpop.f32.mrb[0].mxu0
          %v791 = vpop.f32.mrb[0].mxu0
          %v792 = vadd.f32 %v704, %v791
          %v793 = vpop.f32.mrb[0].mxu0
          %794 = vmatprep.mubr.bf16.mxu0 0
          %795 = vmatmul.mubr.bf16.gmra.mrb[0].mxu0 %v680
          %v796 = vpop.f32.mrb[0].mxu0
          %v797 = vadd.f32 %v704, %v796
          %v798 = vpop.f32.mrb[0].mxu0
          %v799 = vpop.f32.mrb[0].mxu0
          %v800 = vadd.f32 %v704, %v799
          %v801 = vpop.f32.mrb[0].mxu0
          %802 = vmatprep.mubr.bf16.mxu0 0
          %803 = vmatmul.mubr.bf16.gmra.mrb[0].mxu0 %v681
          %v804 = vpop.f32.mrb[0].mxu0
          %v805 = vadd.f32 %v704, %v804
          %v806 = vpop.f32.mrb[0].mxu0
          %v807 = vpop.f32.mrb[0].mxu0
          %v808 = vadd.f32 %v704, %v807
          %v809 = vpop.f32.mrb[0].mxu0
          %810 = vmatprep.mubr.bf16.mxu0 0
          %811 = vmatmul.mubr.bf16.gmra.mrb[0].mxu0 %v682
          %v812 = vpop.f32.mrb[0].mxu0
          %v813 = vadd.f32 %v704, %v812
          %v814 = vpop.f32.mrb[0].mxu0
          %v815 = vpop.f32.mrb[0].mxu0
          %v816 = vadd.f32 %v704, %v815
          %v817 = vpop.f32.mrb[0].mxu0
          %818 = vdwg.mxu0
          %819 = vst [vmem:[%s424] sm:$0xff] %v789
          %820 = vst [vmem:[%s424 + $0x8] sm:$0xff] %v792
          %821 = vst [vmem:[%s424 + $0x10] sm:$0xff] %v797
          %822 = vst [vmem:[%s424 + $0x18] sm:$0xff] %v800
          %823 = vst [vmem:[%s424 + $0x20] sm:$0xff] %v805
          %824 = vst [vmem:[%s424 + $0x28] sm:$0xff] %v808
          %825 = vst [vmem:[%s424 + $0x30] sm:$0xff] %v813
          %826 = vst [vmem:[%s424 + $0x38] sm:$0xff] %v816
          %s827 = smul.u32 %s31, 64
          %v828 = vlaneseq
          %v829 = vshrl.u32 %v828, 7
          %v830 = vadd.s32 %v829, 8
          %v831 = vadd.s32 %v829, 16
          %v832 = vadd.s32 %v829, 24
          %v833 = vadd.s32 %v829, 32
          %v834 = vadd.s32 %v829, 40
          %v835 = vadd.s32 %v829, 48
          %v836 = vadd.s32 %v829, 56
          %v837 = vstv %s827
          %v838 = vadd.s32 %v829, %v837
          %v839 = vadd.s32 %v830, %v837
          %v840 = vadd.s32 %v831, %v837
          %v841 = vadd.s32 %v832, %v837
          %v842 = vadd.s32 %v833, %v837
          %v843 = vadd.s32 %v834, %v837
          %v844 = vadd.s32 %v835, %v837
          %v845 = vadd.s32 %v836, %v837
          %vm846 = vcmp.lt.s32.totalorder %v838, 200
          %vm847 = vcmp.lt.s32.totalorder %v839, 200
          %vm848 = vcmp.lt.s32.totalorder %v840, 200
          %vm849 = vcmp.lt.s32.totalorder %v841, 200
          %vm850 = vcmp.lt.s32.totalorder %v842, 200
          %vm851 = vcmp.lt.s32.totalorder %v843, 200
          %vm852 = vcmp.lt.s32.totalorder %v844, 200
          %vm853 = vcmp.lt.s32.totalorder %v845, 200
          %v854 = vsel %vm846, 1, 0
          %v855 = vsel %vm847, 1, 0
          %v856 = vsel %vm848, 1, 0
          %v857 = vsel %vm849, 1, 0
          %v858 = vsel %vm850, 1, 0
          %v859 = vsel %vm851, 1, 0
          %v860 = vsel %vm852, 1, 0
          %v861 = vsel %vm853, 1, 0
          %v862 = vcvt.s32.f32 %v854
          %v863 = vcvt.s32.f32 %v855
          %v864 = vcvt.s32.f32 %v856
          %v865 = vcvt.s32.f32 %v857
          %v866 = vcvt.s32.f32 %v858
          %v867 = vcvt.s32.f32 %v859
          %v868 = vcvt.s32.f32 %v860
          %v869 = vcvt.s32.f32 %v861
          %v870 = vmul.f32 %v789, %v862
          %v871 = vmul.f32 %v792, %v863
          %v872 = vmul.f32 %v797, %v864
          %v873 = vmul.f32 %v800, %v865
          %v874 = vmul.f32 %v805, %v866
          %v875 = vmul.f32 %v808, %v867
          %v876 = vmul.f32 %v813, %v868
          %v877 = vmul.f32 %v816, %v869
          %v878 = vadd.f32 %v870, %v871
          %v879 = vadd.f32 %v878, %v872
          %v880 = vadd.f32 %v879, %v873
          %v881 = vadd.f32 %v880, %v874
          %v882 = vadd.f32 %v881, %v875
          %v883 = vadd.f32 %v882, %v876
          %v884 = vadd.f32 %v883, %v877
          %v885 = vrot.slane %v884, 4
          %v886 = vadd.f32 %v884, %v885
          %v887 = vrot.slane %v886, 2
          %v888 = vadd.f32 %v886, %v887
          %v889 = vrot.slane %v888, 1
          %v890 = vadd.f32 %v888, %v889
          %v891 = vmul.f32 %v870, %v870
          %v892 = vmul.f32 %v871, %v871
          %v893 = vmul.f32 %v872, %v872
          %v894 = vmul.f32 %v873, %v873
          %v895 = vmul.f32 %v874, %v874
          %v896 = vmul.f32 %v875, %v875
          %v897 = vmul.f32 %v876, %v876
          %v898 = vmul.f32 %v877, %v877
          %v899 = vadd.f32 %v891, %v892
          %v900 = vadd.f32 %v899, %v893
          %v901 = vadd.f32 %v900, %v894
          %v902 = vadd.f32 %v901, %v895
          %v903 = vadd.f32 %v902, %v896
          %v904 = vadd.f32 %v903, %v897
          %v905 = vadd.f32 %v904, %v898
          %v906 = vrot.slane %v905, 4
          %v907 = vadd.f32 %v905, %v906
          %v908 = vrot.slane %v907, 2
          %v909 = vadd.f32 %v907, %v908
          %v910 = vrot.slane %v909, 1
          %v911 = vadd.f32 %v909, %v910
          %vm912 = vcmp.eq.s32.totalorder %v829, 0
          %v913 = vsel %vm912, %v890, 0.0
          %vm914 = vcmp.eq.s32.totalorder %v829, 1
          %v915 = vsel %vm914, %v911, 0.0
          %v916 = vadd.f32 %v913, %v915
          %917 = vst [vmem:[%s429] sm:$0xff] %v916
        $region97: #{gin_layer_forward.3} parent=80 // pred_fallthru
          _
        %s918 = smul.u32 8, %s31
        %p919 = scmp.lt.s32.totalorder %s918, 31
        %s920 = scalar_select %p919, %s918, 31
        %s921 = smul.addr %s920, 8
        %s922 = scalar_lea.vmem %s7, %s921
        %p923 = scmp.lt.s32.totalorder %s31, 3
        %s924 = scalar_select %p923, %s31, 3
        %s925 = smul.addr %s924, 8
        %s926 = scalar_lea.vmem %s8, %s925
        // Predicated region
        $region98: #{gin_layer_forward.3} parent=80 // pred_check
          %p927 = pneg %p200
        $region99: #{gin_layer_forward.3} parent=80 // pred_check_branch
          %929 = sbr.rel (%p927) target = $region101
        $region100: #{gin_layer_forward.3} parent=80 // pred_region
          %s930 = smul.u32 8, %s31
        $region101: #{gin_layer_forward.3} parent=80 // pred_fallthru
          _
        // Predicated region
        $region102: #{gin_layer_forward.3} parent=80 // pred_check
          %p931 = pneg %p226
        $region103: #{gin_layer_forward.3} parent=80 // pred_check_branch
          %933 = sbr.rel (%p931) target = $region105
        $region104: #{gin_layer_forward.3} parent=80 // pred_region
          _
        $region105: #{gin_layer_forward.3} parent=80 // pred_fallthru
          _
      $region81: #{gin_layer_forward.3} parent=5 // pred_fallthru
        _
      %p934 = scmp.le.s32.totalorder 2, %s22
      // Predicated region
      $region106: #{gin_layer_forward.3} parent=5 // pred_check
        %p935 = pneg %p934
      $region107: #{gin_layer_forward.3} parent=5 // pred_check_branch
        %937 = sbr.rel (%p935) target = $region109
      $region108: #{gin_layer_forward.3} parent=5 // pred_region
        %s938 = ssub.s32 %s22, 2
        // Predicated region
        $region110: #{gin_layer_forward.3} parent=108 // pred_check
          %p939 = pneg %p206
        $region111: #{gin_layer_forward.3} parent=108 // pred_check_branch
          %941 = sbr.rel (%p939) target = $region113
        $region112: #{gin_layer_forward.3} parent=108 // pred_region
          %s942 = smul.u32 8, %s33
          %p943 = scmp.lt.s32.totalorder %s942, 31
          %s944 = scalar_select %p943, %s942, 31
          %s945 = smul.addr %s944, 8
          %s946 = scalar_lea.vmem %s7, %s945
        $region113: #{gin_layer_forward.3} parent=108 // pred_fallthru
          _
        // Predicated region
        $region114: #{gin_layer_forward.3} parent=108 // pred_check
          %p947 = pneg %p232
        $region115: #{gin_layer_forward.3} parent=108 // pred_check_branch
          %949 = sbr.rel (%p947) target = $region117
        $region116: #{gin_layer_forward.3} parent=108 // pred_region
          %p950 = scmp.lt.s32.totalorder %s33, 3
          %s951 = scalar_select %p950, %s33, 3
          %s952 = smul.addr %s951, 8
          %s953 = scalar_lea.vmem %s8, %s952
        $region117: #{gin_layer_forward.3} parent=108 // pred_fallthru
          _
      $region109: #{gin_layer_forward.3} parent=5 // pred_fallthru
        _
    $region6: #{gin_layer_forward.3} parent=1 // loop_footer
      %s26 = sadd.s32 1, %s22
    $region7: #{gin_layer_forward.3} parent=1 // loop_footer_branch
      %21 = sbr.rel target = $region3
    $region8: #{gin_layer_forward.3} parent=1 // loop_exit
      _

// kernel: gin_layer_forward.4
$region0: #{gin_layer_forward.4}
  #allocation0 [shape = 'u32[]', space=smem, size = 0x4, offset = 0x4, fixed_abs, tag = 'smem constant byte address 0x4 - core index']
  #allocation1 [shape = 'u32[144,128]{1,0:T(1,128)}', space=vmem, size = 0x12000, scoped, tag = 'internal scratch']
  %s0 = inlined_call_operand.vmem [shape: f32[1,128], index: 0, kind: input, shape index: {}]
  %s1 = inlined_call_operand.vmem [shape: f32[1,128], index: 1, kind: input, shape index: {}]
  %s2 = inlined_call_operand.vmem [shape: f32[256,128], index: 2, kind: input, shape index: {}]
  %s3 = inlined_call_operand.vmem [shape: bf16[128,128], index: 3, kind: input, shape index: {}]
  %s4 = inlined_call_operand.vmem [shape: f32[1,128], index: 4, kind: input, shape index: {}]
  %s5 = inlined_call_operand.vmem [shape: f32[256,128], index: 5, kind: output, shape index: {0}]
  %s6 = inlined_call_operand.vmem [shape: f32[4,8,128], index: 6, kind: output, shape index: {1}]
  %7 = xla_tuple %s5, %s6
  %s8 = sld [smem:[#allocation0]]
  $region61: #{gin_layer_forward.4} parent=0
    _
  %s10 = ssub.s32 1, %s8
  %s11 = scalar_select 0, %s10, %s8
  loop: start=0, step=1, limit=6
  $region2: #{gin_layer_forward.4} parent=0 // loop_pre_header
    _
  $region3: #{gin_layer_forward.4} parent=0 // loop_header
    %s13 = sphi 0, %s17
    %p14 = scmp.ge.s32.totalorder %s13, 6
    %s21 = sphi 0, %s21
    %s23 = sphi 0, %s21
    %s24 = sphi 0, %s23
    %s38 = sphi 0, %s24
    %s42 = sphi 0, %s42
    %s44 = sphi 0, %s42
    %s45 = sphi 0, %s44
    %s59 = sphi 0, %s45
    %s65 = sphi 0, %s67
    %s68 = sphi 0, %s65
    %s69 = sphi 0, %s68
    %s85 = sphi 0, %s69
    %s89 = sphi 0, %s89
    %s91 = sphi 0, %s89
    %s92 = sphi 0, %s91
    %s106 = sphi 0, %s92
    %s110 = sphi 0, %s110
    %s112 = sphi 0, %s110
    %s113 = sphi 0, %s112
    %s127 = sphi 0, %s113
    %s133 = sphi 0, %s135
    %s136 = sphi 0, %s133
    %s137 = sphi 0, %s136
    %s153 = sphi 0, %s137
    %s159 = sphi 0, %s161
    %s162 = sphi 0, %s159
    %s163 = sphi 0, %s162
    %s179 = sphi 0, %s163
  $region4: #{gin_layer_forward.4} parent=0 // loop_header_branch
    %16 = sbr.rel (%p14) target = $region8
  $region5: #{gin_layer_forward.4} parent=0 // loop_body
    %s18 = ssub.s32 %s13, 1
    %s19 = ssub.s32 %s13, 2
    %s20 = sadd.s32 %s13, 1
    %s22 = sadd.s32 %s21, 1
    %p25 = scmp.eq.s32.totalorder %s13, 3
    %p26 = scmp.ne.s32.totalorder %s21, %s23
    %p27 = scmp.eq.s32.totalorder %s13, 0
    %p28 = por %p26, %p27
    %p29 = scmp.ne.s32.totalorder %s21, %s23
    %p30 = scmp.eq.s32.totalorder %s18, 3
    %p31 = por %p29, %p30
    %p32 = scmp.ne.s32.totalorder %s23, %s24
    %p33 = scmp.eq.s32.totalorder %s18, 0
    %p34 = por %p32, %p33
    %p35 = scmp.ne.s32.totalorder %s23, %s24
    %p36 = scmp.eq.s32.totalorder %s19, 3
    %p37 = por %p35, %p36
    %p39 = scmp.ne.s32.totalorder %s24, %s38
    %p40 = scmp.eq.s32.totalorder %s19, 0
    %p41 = por %p39, %p40
    %s43 = sadd.s32 %s42, 1
    %p46 = scmp.eq.s32.totalorder %s13, 3
    %p47 = scmp.ne.s32.totalorder %s42, %s44
    %p48 = scmp.eq.s32.totalorder %s13, 0
    %p49 = por %p47, %p48
    %p50 = scmp.ne.s32.totalorder %s42, %s44
    %p51 = scmp.eq.s32.totalorder %s18, 3
    %p52 = por %p50, %p51
    %p53 = scmp.ne.s32.totalorder %s44, %s45
    %p54 = scmp.eq.s32.totalorder %s18, 0
    %p55 = por %p53, %p54
    %p56 = scmp.ne.s32.totalorder %s44, %s45
    %p57 = scmp.eq.s32.totalorder %s19, 3
    %p58 = por %p56, %p57
    %p60 = scmp.ne.s32.totalorder %s45, %s59
    %p61 = scmp.eq.s32.totalorder %s19, 0
    %p62 = por %p60, %p61
    %s63 = ssub.s32 %s13, %s20
    %p64 = scmp.eq.s32.totalorder %s63, 0
    %s66 = sadd.s32 %s65, 1
    %s67 = scalar_select %p64, %s65, %s66
    %p70 = pneg %p64
    %p71 = scmp.eq.s32.totalorder %s13, 3
    %p72 = por %p70, %p71
    %p73 = scmp.ne.s32.totalorder %s65, %s68
    %p74 = scmp.eq.s32.totalorder %s13, 0
    %p75 = por %p73, %p74
    %p76 = scmp.ne.s32.totalorder %s65, %s68
    %p77 = scmp.eq.s32.totalorder %s18, 3
    %p78 = por %p76, %p77
    %p79 = scmp.ne.s32.totalorder %s68, %s69
    %p80 = scmp.eq.s32.totalorder %s18, 0
    %p81 = por %p79, %p80
    %p82 = scmp.ne.s32.totalorder %s68, %s69
    %p83 = scmp.eq.s32.totalorder %s19, 3
    %p84 = por %p82, %p83
    %p86 = scmp.ne.s32.totalorder %s69, %s85
    %p87 = scmp.eq.s32.totalorder %s19, 0
    %p88 = por %p86, %p87
    %s90 = sadd.s32 %s89, 1
    %p93 = scmp.eq.s32.totalorder %s13, 3
    %p94 = scmp.ne.s32.totalorder %s89, %s91
    %p95 = scmp.eq.s32.totalorder %s13, 0
    %p96 = por %p94, %p95
    %p97 = scmp.ne.s32.totalorder %s89, %s91
    %p98 = scmp.eq.s32.totalorder %s18, 3
    %p99 = por %p97, %p98
    %p100 = scmp.ne.s32.totalorder %s91, %s92
    %p101 = scmp.eq.s32.totalorder %s18, 0
    %p102 = por %p100, %p101
    %p103 = scmp.ne.s32.totalorder %s91, %s92
    %p104 = scmp.eq.s32.totalorder %s19, 3
    %p105 = por %p103, %p104
    %p107 = scmp.ne.s32.totalorder %s92, %s106
    %p108 = scmp.eq.s32.totalorder %s19, 0
    %p109 = por %p107, %p108
    %s111 = sadd.s32 %s110, 1
    %p114 = scmp.eq.s32.totalorder %s13, 3
    %p115 = scmp.ne.s32.totalorder %s110, %s112
    %p116 = scmp.eq.s32.totalorder %s13, 0
    %p117 = por %p115, %p116
    %p118 = scmp.ne.s32.totalorder %s110, %s112
    %p119 = scmp.eq.s32.totalorder %s18, 3
    %p120 = por %p118, %p119
    %p121 = scmp.ne.s32.totalorder %s112, %s113
    %p122 = scmp.eq.s32.totalorder %s18, 0
    %p123 = por %p121, %p122
    %p124 = scmp.ne.s32.totalorder %s112, %s113
    %p125 = scmp.eq.s32.totalorder %s19, 3
    %p126 = por %p124, %p125
    %p128 = scmp.ne.s32.totalorder %s113, %s127
    %p129 = scmp.eq.s32.totalorder %s19, 0
    %p130 = por %p128, %p129
    %s131 = ssub.s32 %s13, %s20
    %p132 = scmp.eq.s32.totalorder %s131, 0
    %s134 = sadd.s32 %s133, 1
    %s135 = scalar_select %p132, %s133, %s134
    %p138 = pneg %p132
    %p139 = scmp.eq.s32.totalorder %s13, 3
    %p140 = por %p138, %p139
    %p141 = scmp.ne.s32.totalorder %s133, %s136
    %p142 = scmp.eq.s32.totalorder %s13, 0
    %p143 = por %p141, %p142
    %p144 = scmp.ne.s32.totalorder %s133, %s136
    %p145 = scmp.eq.s32.totalorder %s18, 3
    %p146 = por %p144, %p145
    %p147 = scmp.ne.s32.totalorder %s136, %s137
    %p148 = scmp.eq.s32.totalorder %s18, 0
    %p149 = por %p147, %p148
    %p150 = scmp.ne.s32.totalorder %s136, %s137
    %p151 = scmp.eq.s32.totalorder %s19, 3
    %p152 = por %p150, %p151
    %p154 = scmp.ne.s32.totalorder %s137, %s153
    %p155 = scmp.eq.s32.totalorder %s19, 0
    %p156 = por %p154, %p155
    %s157 = ssub.s32 %s13, %s20
    %p158 = scmp.eq.s32.totalorder %s157, 0
    %s160 = sadd.s32 %s159, 1
    %s161 = scalar_select %p158, %s159, %s160
    %p164 = pneg %p158
    %p165 = scmp.eq.s32.totalorder %s13, 3
    %p166 = por %p164, %p165
    %p167 = scmp.ne.s32.totalorder %s159, %s162
    %p168 = scmp.eq.s32.totalorder %s13, 0
    %p169 = por %p167, %p168
    %p170 = scmp.ne.s32.totalorder %s159, %s162
    %p171 = scmp.eq.s32.totalorder %s18, 3
    %p172 = por %p170, %p171
    %p173 = scmp.ne.s32.totalorder %s162, %s163
    %p174 = scmp.eq.s32.totalorder %s18, 0
    %p175 = por %p173, %p174
    %p176 = scmp.ne.s32.totalorder %s162, %s163
    %p177 = scmp.eq.s32.totalorder %s19, 3
    %p178 = por %p176, %p177
    %p180 = scmp.ne.s32.totalorder %s163, %s179
    %p181 = scmp.eq.s32.totalorder %s19, 0
    %p182 = por %p180, %p181
    %p183 = scmp.le.s32.totalorder 1, %s13
    %p184 = scmp.lt.s32.totalorder %s13, 5
    %p185 = pnand %p183, %p184
    %p186 = pneg %p185
    // Predicated region
    $region9: #{gin_layer_forward.4} parent=5 // pred_check
      _
    $region10: #{gin_layer_forward.4} parent=5 // pred_check_branch
      %188 = sbr.rel (%p185) target = $region12
    $region11: #{gin_layer_forward.4} parent=5 // pred_region
      %s189 = ssub.s32 %s13, 1
      // Predicated region
      $region13: #{gin_layer_forward.4} parent=11 // pred_check
        %p190 = pneg %p34
      $region14: #{gin_layer_forward.4} parent=11 // pred_check_branch
        %192 = sbr.rel (%p190) target = $region16
      $region15: #{gin_layer_forward.4} parent=11 // pred_region
        _
      $region16: #{gin_layer_forward.4} parent=11 // pred_fallthru
        _
      // Predicated region
      $region17: #{gin_layer_forward.4} parent=11 // pred_check
        %p193 = pneg %p55
      $region18: #{gin_layer_forward.4} parent=11 // pred_check_branch
        %195 = sbr.rel (%p193) target = $region20
      $region19: #{gin_layer_forward.4} parent=11 // pred_region
        _
      $region20: #{gin_layer_forward.4} parent=11 // pred_fallthru
        _
      // Predicated region
      $region21: #{gin_layer_forward.4} parent=11 // pred_check
        %p196 = pneg %p102
      $region22: #{gin_layer_forward.4} parent=11 // pred_check_branch
        %198 = sbr.rel (%p196) target = $region24
      $region23: #{gin_layer_forward.4} parent=11 // pred_region
        _
      $region24: #{gin_layer_forward.4} parent=11 // pred_fallthru
        _
      // Predicated region
      $region25: #{gin_layer_forward.4} parent=11 // pred_check
        %p199 = pneg %p123
      $region26: #{gin_layer_forward.4} parent=11 // pred_check_branch
        %201 = sbr.rel (%p199) target = $region28
      $region27: #{gin_layer_forward.4} parent=11 // pred_region
        _
      $region28: #{gin_layer_forward.4} parent=11 // pred_fallthru
        _
    $region12: #{gin_layer_forward.4} parent=5 // pred_fallthru
      _
    %p202 = scmp.lt.s32.totalorder %s13, 4
    // Predicated region
    $region29: #{gin_layer_forward.4} parent=5 // pred_check
      %p203 = pneg %p202
    $region30: #{gin_layer_forward.4} parent=5 // pred_check_branch
      %205 = sbr.rel (%p203) target = $region32
    $region31: #{gin_layer_forward.4} parent=5 // pred_region
      // Predicated region
      $region33: #{gin_layer_forward.4} parent=31 // pred_check
        %p206 = pneg %p75
      $region34: #{gin_layer_forward.4} parent=31 // pred_check_branch
        %208 = sbr.rel (%p206) target = $region36
      $region35: #{gin_layer_forward.4} parent=31 // pred_region
        %s209 = smul.u32 8, %s13
        %p210 = scmp.lt.s32.totalorder %s209, 31
        %s211 = scalar_select %p210, %s209, 31
        %s212 = smul.addr %s211, 8
        %s213 = scalar_lea.vmem %s2, %s212
        %s214 = smul.u32 8, %s13
      $region36: #{gin_layer_forward.4} parent=31 // pred_fallthru
        _
    $region32: #{gin_layer_forward.4} parent=5 // pred_fallthru
      _
    %p215 = scmp.le.s32.totalorder 1, %s13
    %p216 = scmp.lt.s32.totalorder %s13, 5
    %p217 = pnand %p215, %p216
    %p218 = pneg %p217
    // Predicated region
    $region37: #{gin_layer_forward.4} parent=5 // pred_check
      _
    $region38: #{gin_layer_forward.4} parent=5 // pred_check_branch
      %220 = sbr.rel (%p217) target = $region40
    $region39: #{gin_layer_forward.4} parent=5 // pred_region
      %s221 = ssub.s32 %s13, 1
      %p222 = pneg %p34
      %p223 = pneg %p31
      %p224 = pneg %p55
      %p225 = pneg %p52
      %s226 = smul.u32 8, %s18
      %p227 = scmp.lt.s32.totalorder %s226, 31
      %s228 = scalar_select %p227, %s226, 31
      %s229 = smul.addr %s228, 8
      %s230 = scalar_lea.vmem %s2, %s229
      %p231 = pneg %p81
      %p232 = pneg %p78
      %p233 = pneg %p102
      %p234 = pneg %p99
      %p235 = pneg %p123
      %p236 = pneg %p120
      %p237 = pneg %p149
      %p238 = pneg %p146
      %s239 = smul.u32 8, %s18
      %p240 = scmp.lt.s32.totalorder %s239, 31
      %s241 = scalar_select %p240, %s239, 31
      %s242 = smul.addr %s241, 8
      %s243 = scalar_lea.vmem %s5, %s242
      %p244 = pneg %p175
      %p245 = pneg %p172
      %p246 = scmp.lt.s32.totalorder %s18, 3
      %s247 = scalar_select %p246, %s18, 3
      %s248 = smul.addr %s247, 8
      %s249 = scalar_lea.vmem %s6, %s248
      %s250 = smul.u32 8, %s18
      %p251 = scmp.lt.s32.totalorder %s250, 31
      %s252 = scalar_select %p251, %s250, 31
      %s253 = smul.addr %s252, 8
      %s254 = scalar_lea.vmem %s2, %s253
      %s255 = smul.u32 8, %s18
      %s256 = smul.u32 8, %s18
      %p257 = scmp.lt.s32.totalorder %s256, 31
      %s258 = scalar_select %p257, %s256, 31
      %s259 = smul.addr %s258, 8
      %s260 = scalar_lea.vmem %s5, %s259
      %s261 = smul.u32 8, %s18
      %p262 = scmp.lt.s32.totalorder %s18, 3
      %s263 = scalar_select %p262, %s18, 3
      %s264 = smul.addr %s263, 8
      %s265 = scalar_lea.vmem %s6, %s264
      %v267 = vld [vmem:[%s254] sm:$0xff]
      %v268 = vld [vmem:[%s254 + $0x8] sm:$0xff]
      %v269 = vld [vmem:[%s254 + $0x10] sm:$0xff]
      %v270 = vld [vmem:[%s254 + $0x18] sm:$0xff]
      %v271 = vld [vmem:[%s254 + $0x20] sm:$0xff]
      %v272 = vld [vmem:[%s254 + $0x28] sm:$0xff]
      %v273 = vld [vmem:[%s254 + $0x30] sm:$0xff]
      %v274 = vld [vmem:[%s254 + $0x38] sm:$0xff]
      %v275 = vld [vmem:[%s0] sm:$0x1]
      %v277 = vlaneseq
      %v278 = vshrl.u32 %v277, 7
      %v279 = vsub.s32 0, %v278
      %v280 = vrot.slane %v275, %v279
      %v282 = vmul.f32 %v267, %v280
      %v283 = vmul.f32 %v268, %v280
      %v284 = vmul.f32 %v269, %v280
      %v285 = vmul.f32 %v270, %v280
      %v286 = vmul.f32 %v271, %v280
      %v287 = vmul.f32 %v272, %v280
      %v288 = vmul.f32 %v273, %v280
      %v289 = vmul.f32 %v274, %v280
      %v290 = vld [vmem:[%s1] sm:$0x1]
      %v292 = vlaneseq
      %v293 = vshrl.u32 %v292, 7
      %v294 = vsub.s32 0, %v293
      %v295 = vrot.slane %v290, %v294
      %v297 = vadd.f32 %v282, %v295
      %v298 = vadd.f32 %v283, %v295
      %v299 = vadd.f32 %v284, %v295
      %v300 = vadd.f32 %v285, %v295
      %v301 = vadd.f32 %v286, %v295
      %v302 = vadd.f32 %v287, %v295
      %v303 = vadd.f32 %v288, %v295
      %v304 = vadd.f32 %v289, %v295
      %v305 = vmax.f32 %v297, 0.0
      %v306 = vmax.f32 %v298, 0.0
      %v307 = vmax.f32 %v299, 0.0
      %v308 = vmax.f32 %v300, 0.0
      %v309 = vmax.f32 %v301, 0.0
      %v310 = vmax.f32 %v302, 0.0
      %v311 = vmax.f32 %v303, 0.0
      %v312 = vmax.f32 %v304, 0.0
      %v313 = vpack.c.bf16 %v306, %v305
      %v314 = vpack.c.bf16 %v308, %v307
      %v315 = vpack.c.bf16 %v310, %v309
      %v316 = vpack.c.bf16 %v312, %v311
      %v317 = vld [vmem:[%s3] sm:$0xf]
      %v318 = vld [vmem:[%s3 + $0x4] sm:$0xf]
      %v319 = vld [vmem:[%s3 + $0x8] sm:$0xf]
      %v320 = vld [vmem:[%s3 + $0xc] sm:$0xf]
      %v321 = vld [vmem:[%s3 + $0x10] sm:$0xf]
      %v322 = vld [vmem:[%s3 + $0x14] sm:$0xf]
      %v323 = vld [vmem:[%s3 + $0x18] sm:$0xf]
      %v324 = vld [vmem:[%s3 + $0x1c] sm:$0xf]
      %v325 = vld [vmem:[%s3 + $0x20] sm:$0xf]
      %v326 = vld [vmem:[%s3 + $0x24] sm:$0xf]
      %v327 = vld [vmem:[%s3 + $0x28] sm:$0xf]
      %v328 = vld [vmem:[%s3 + $0x2c] sm:$0xf]
      %v329 = vld [vmem:[%s3 + $0x30] sm:$0xf]
      %v330 = vld [vmem:[%s3 + $0x34] sm:$0xf]
      %v331 = vld [vmem:[%s3 + $0x38] sm:$0xf]
      %v332 = vld [vmem:[%s3 + $0x3c] sm:$0xf]
      %v333 = vld [vmem:[%s4] sm:$0x1]
      %v335 = vlaneseq
      %v336 = vshrl.u32 %v335, 7
      %v337 = vsub.s32 0, %v336
      %v338 = vrot.slane %v333, %v337
      %v356 = vunpack.c.l.b16 %v317
      %v357 = vunpack.c.l.b16 %v318
      %v358 = vunpack.c.l.b16 %v319
      %v359 = vunpack.c.l.b16 %v320
      %v360 = vunpack.c.l.b16 %v321
      %v361 = vunpack.c.l.b16 %v322
      %v362 = vunpack.c.l.b16 %v323
      %v363 = vunpack.c.l.b16 %v324
      %v364 = vunpack.c.l.b16 %v325
      %v365 = vunpack.c.l.b16 %v326
      %v366 = vunpack.c.l.b16 %v327
      %v367 = vunpack.c.l.b16 %v328
      %v368 = vunpack.c.l.b16 %v329
      %v369 = vunpack.c.l.b16 %v330
      %v370 = vunpack.c.l.b16 %v331
      %v371 = vunpack.c.l.b16 %v332
      %v372 = vpack.c.b16 %v357, %v356
      %v373 = vpack.c.b16 %v359, %v358
      %v374 = vpack.c.b16 %v361, %v360
      %v375 = vpack.c.b16 %v363, %v362
      %v376 = vpack.c.b16 %v365, %v364
      %v377 = vpack.c.b16 %v367, %v366
      %v378 = vpack.c.b16 %v369, %v368
      %v379 = vpack.c.b16 %v371, %v370
      %388 = vmatprep.subr.bf16.mxu0 0
      %389 = vmatpush1.bf16.xpose.msra.mxu0 %v372
      %390 = vmatprep.subr.bf16.mxu0 0
      %391 = vmatpush1.bf16.xpose.msra.mxu0 %v373
      %392 = vmatprep.subr.bf16.mxu0 0
      %393 = vmatpush1.bf16.xpose.msra.mxu0 %v374
      %394 = vmatprep.subr.bf16.mxu0 0
      %395 = vmatpush1.bf16.xpose.msra.mxu0 %v375
      %396 = vmatprep.subr.bf16.mxu0 0
      %397 = vmatpush1.bf16.xpose.msra.mxu0 %v376
      %398 = vmatprep.subr.bf16.mxu0 0
      %399 = vmatpush1.bf16.xpose.msra.mxu0 %v377
      %400 = vmatprep.subr.bf16.mxu0 0
      %401 = vmatpush1.bf16.xpose.msra.mxu0 %v378
      %402 = vmatprep.subr.bf16.mxu0 0
      %403 = vmatpush1.bf16.xpose.msra.mxu0 %v379
      %404 = vmatprep.subr.bf16.mxu0 0
      %405 = vmatpush1.bf16.xpose.msra.mxu0 0
      %406 = vmatprep.subr.bf16.mxu0 0
      %407 = vmatpush1.bf16.xpose.msra.mxu0 0
      %408 = vmatprep.subr.bf16.mxu0 0
      %409 = vmatpush1.bf16.xpose.msra.mxu0 0
      %410 = vmatprep.subr.bf16.mxu0 0
      %411 = vmatpush1.bf16.xpose.msra.mxu0 0
      %412 = vmatprep.subr.bf16.mxu0 0
      %413 = vmatpush1.bf16.xpose.msra.mxu0 0
      %414 = vmatprep.subr.bf16.mxu0 0
      %415 = vmatpush1.bf16.xpose.msra.mxu0 0
      %416 = vmatprep.subr.bf16.mxu0 0
      %417 = vmatpush1.bf16.xpose.msra.mxu0 0
      %418 = vmatprep.subr.bf16.mxu0 0
      %419 = vmatpush1.bf16.xpose.msra.mxu0 0
      %420 = vmatprep.mubr.bf16.mxu0 0
      %421 = vmatmul.mubr.bf16.gmra.mrb[0].mxu0 %v313
      %v422 = vpop.f32.mrb[0].mxu0
      %v423 = vadd.f32 %v338, %v422
      %v424 = vpop.f32.mrb[0].mxu0
      %v425 = vpop.f32.mrb[0].mxu0
      %v426 = vadd.f32 %v338, %v425
      %v427 = vpop.f32.mrb[0].mxu0
      %428 = vmatprep.mubr.bf16.mxu0 0
      %429 = vmatmul.mubr.bf16.gmra.mrb[0].mxu0 %v314
      %v430 = vpop.f32.mrb[0].mxu0
      %v431 = vadd.f32 %v338, %v430
      %v432 = vpop.f32.mrb[0].mxu0
      %v433 = vpop.f32.mrb[0].mxu0
      %v434 = vadd.f32 %v338, %v433
      %v435 = vpop.f32.mrb[0].mxu0
      %436 = vmatprep.mubr.bf16.mxu0 0
      %437 = vmatmul.mubr.bf16.gmra.mrb[0].mxu0 %v315
      %v438 = vpop.f32.mrb[0].mxu0
      %v439 = vadd.f32 %v338, %v438
      %v440 = vpop.f32.mrb[0].mxu0
      %v441 = vpop.f32.mrb[0].mxu0
      %v442 = vadd.f32 %v338, %v441
      %v443 = vpop.f32.mrb[0].mxu0
      %444 = vmatprep.mubr.bf16.mxu0 0
      %445 = vmatmul.mubr.bf16.gmra.mrb[0].mxu0 %v316
      %v446 = vpop.f32.mrb[0].mxu0
      %v447 = vadd.f32 %v338, %v446
      %v448 = vpop.f32.mrb[0].mxu0
      %v449 = vpop.f32.mrb[0].mxu0
      %v450 = vadd.f32 %v338, %v449
      %v451 = vpop.f32.mrb[0].mxu0
      %452 = vdwg.mxu0
      %453 = vst [vmem:[%s260] sm:$0xff] %v423
      %454 = vst [vmem:[%s260 + $0x8] sm:$0xff] %v426
      %455 = vst [vmem:[%s260 + $0x10] sm:$0xff] %v431
      %456 = vst [vmem:[%s260 + $0x18] sm:$0xff] %v434
      %457 = vst [vmem:[%s260 + $0x20] sm:$0xff] %v439
      %458 = vst [vmem:[%s260 + $0x28] sm:$0xff] %v442
      %459 = vst [vmem:[%s260 + $0x30] sm:$0xff] %v447
      %460 = vst [vmem:[%s260 + $0x38] sm:$0xff] %v450
      %s461 = smul.u32 %s18, 64
      %v462 = vlaneseq
      %v463 = vshrl.u32 %v462, 7
      %v464 = vadd.s32 %v463, 8
      %v465 = vadd.s32 %v463, 16
      %v466 = vadd.s32 %v463, 24
      %v467 = vadd.s32 %v463, 32
      %v468 = vadd.s32 %v463, 40
      %v469 = vadd.s32 %v463, 48
      %v470 = vadd.s32 %v463, 56
      %v471 = vstv %s461
      %v472 = vadd.s32 %v463, %v471
      %v473 = vadd.s32 %v464, %v471
      %v474 = vadd.s32 %v465, %v471
      %v475 = vadd.s32 %v466, %v471
      %v476 = vadd.s32 %v467, %v471
      %v477 = vadd.s32 %v468, %v471
      %v478 = vadd.s32 %v469, %v471
      %v479 = vadd.s32 %v470, %v471
      %vm480 = vcmp.lt.s32.totalorder %v472, 200
      %vm481 = vcmp.lt.s32.totalorder %v473, 200
      %vm482 = vcmp.lt.s32.totalorder %v474, 200
      %vm483 = vcmp.lt.s32.totalorder %v475, 200
      %vm484 = vcmp.lt.s32.totalorder %v476, 200
      %vm485 = vcmp.lt.s32.totalorder %v477, 200
      %vm486 = vcmp.lt.s32.totalorder %v478, 200
      %vm487 = vcmp.lt.s32.totalorder %v479, 200
      %v488 = vsel %vm480, 1, 0
      %v489 = vsel %vm481, 1, 0
      %v490 = vsel %vm482, 1, 0
      %v491 = vsel %vm483, 1, 0
      %v492 = vsel %vm484, 1, 0
      %v493 = vsel %vm485, 1, 0
      %v494 = vsel %vm486, 1, 0
      %v495 = vsel %vm487, 1, 0
      %v496 = vcvt.s32.f32 %v488
      %v497 = vcvt.s32.f32 %v489
      %v498 = vcvt.s32.f32 %v490
      %v499 = vcvt.s32.f32 %v491
      %v500 = vcvt.s32.f32 %v492
      %v501 = vcvt.s32.f32 %v493
      %v502 = vcvt.s32.f32 %v494
      %v503 = vcvt.s32.f32 %v495
      %v504 = vmul.f32 %v423, %v496
      %v505 = vmul.f32 %v426, %v497
      %v506 = vmul.f32 %v431, %v498
      %v507 = vmul.f32 %v434, %v499
      %v508 = vmul.f32 %v439, %v500
      %v509 = vmul.f32 %v442, %v501
      %v510 = vmul.f32 %v447, %v502
      %v511 = vmul.f32 %v450, %v503
      %v512 = vadd.f32 %v504, %v505
      %v513 = vadd.f32 %v512, %v506
      %v514 = vadd.f32 %v513, %v507
      %v515 = vadd.f32 %v514, %v508
      %v516 = vadd.f32 %v515, %v509
      %v517 = vadd.f32 %v516, %v510
      %v518 = vadd.f32 %v517, %v511
      %v519 = vrot.slane %v518, 4
      %v520 = vadd.f32 %v518, %v519
      %v521 = vrot.slane %v520, 2
      %v522 = vadd.f32 %v520, %v521
      %v523 = vrot.slane %v522, 1
      %v524 = vadd.f32 %v522, %v523
      %v525 = vmul.f32 %v504, %v504
      %v526 = vmul.f32 %v505, %v505
      %v527 = vmul.f32 %v506, %v506
      %v528 = vmul.f32 %v507, %v507
      %v529 = vmul.f32 %v508, %v508
      %v530 = vmul.f32 %v509, %v509
      %v531 = vmul.f32 %v510, %v510
      %v532 = vmul.f32 %v511, %v511
      %v533 = vadd.f32 %v525, %v526
      %v534 = vadd.f32 %v533, %v527
      %v535 = vadd.f32 %v534, %v528
      %v536 = vadd.f32 %v535, %v529
      %v537 = vadd.f32 %v536, %v530
      %v538 = vadd.f32 %v537, %v531
      %v539 = vadd.f32 %v538, %v532
      %v540 = vrot.slane %v539, 4
      %v541 = vadd.f32 %v539, %v540
      %v542 = vrot.slane %v541, 2
      %v543 = vadd.f32 %v541, %v542
      %v544 = vrot.slane %v543, 1
      %v545 = vadd.f32 %v543, %v544
      %vm546 = vcmp.eq.s32.totalorder %v463, 0
      %v547 = vsel %vm546, %v524, 0.0
      %vm548 = vcmp.eq.s32.totalorder %v463, 1
      %v549 = vsel %vm548, %v545, 0.0
      %v550 = vadd.f32 %v547, %v549
      %551 = vst [vmem:[%s265] sm:$0xff] %v550
      %s552 = smul.u32 8, %s18
      %p553 = scmp.lt.s32.totalorder %s552, 31
      %s554 = scalar_select %p553, %s552, 31
      %s555 = smul.addr %s554, 8
      %s556 = scalar_lea.vmem %s5, %s555
      %p557 = scmp.lt.s32.totalorder %s18, 3
      %s558 = scalar_select %p557, %s18, 3
      %s559 = smul.addr %s558, 8
      %s560 = scalar_lea.vmem %s6, %s559
      // Predicated region
      $region41: #{gin_layer_forward.4} parent=39 // pred_check
        %p561 = pneg %p146
      $region42: #{gin_layer_forward.4} parent=39 // pred_check_branch
        %563 = sbr.rel (%p561) target = $region44
      $region43: #{gin_layer_forward.4} parent=39 // pred_region
        %s564 = smul.u32 8, %s18
      $region44: #{gin_layer_forward.4} parent=39 // pred_fallthru
        _
      // Predicated region
      $region45: #{gin_layer_forward.4} parent=39 // pred_check
        %p565 = pneg %p172
      $region46: #{gin_layer_forward.4} parent=39 // pred_check_branch
        %567 = sbr.rel (%p565) target = $region48
      $region47: #{gin_layer_forward.4} parent=39 // pred_region
        _
      $region48: #{gin_layer_forward.4} parent=39 // pred_fallthru
        _
    $region40: #{gin_layer_forward.4} parent=5 // pred_fallthru
      _
    %p568 = scmp.le.s32.totalorder 2, %s13
    // Predicated region
    $region49: #{gin_layer_forward.4} parent=5 // pred_check
      %p569 = pneg %p568
    $region50: #{gin_layer_forward.4} parent=5 // pred_check_branch
      %571 = sbr.rel (%p569) target = $region52
    $region51: #{gin_layer_forward.4} parent=5 // pred_region
      %s572 = ssub.s32 %s13, 2
      // Predicated region
      $region53: #{gin_layer_forward.4} parent=51 // pred_check
        %p573 = pneg %p152
      $region54: #{gin_layer_forward.4} parent=51 // pred_check_branch
        %575 = sbr.rel (%p573) target = $region56
      $region55: #{gin_layer_forward.4} parent=51 // pred_region
        %s576 = smul.u32 8, %s19
        %p577 = scmp.lt.s32.totalorder %s576, 31
        %s578 = scalar_select %p577, %s576, 31
        %s579 = smul.addr %s578, 8
        %s580 = scalar_lea.vmem %s5, %s579
      $region56: #{gin_layer_forward.4} parent=51 // pred_fallthru
        _
      // Predicated region
      $region57: #{gin_layer_forward.4} parent=51 // pred_check
        %p581 = pneg %p178
      $region58: #{gin_layer_forward.4} parent=51 // pred_check_branch
        %583 = sbr.rel (%p581) target = $region60
      $region59: #{gin_layer_forward.4} parent=51 // pred_region
        %p584 = scmp.lt.s32.totalorder %s19, 3
        %s585 = scalar_select %p584, %s19, 3
        %s586 = smul.addr %s585, 8
        %s587 = scalar_lea.vmem %s6, %s586
      $region60: #{gin_layer_forward.4} parent=51 // pred_fallthru
        _
    $region52: #{gin_layer_forward.4} parent=5 // pred_fallthru
      _
  $region6: #{gin_layer_forward.4} parent=0 // loop_footer
    %s17 = sadd.s32 1, %s13
  $region7: #{gin_layer_forward.4} parent=0 // loop_footer_branch
    %12 = sbr.rel target = $region3
  $region8: #{gin_layer_forward.4} parent=0 // loop_exit
    _

</llo_original>
